<compile_context>
chip_gen: v6e
topology: v6e:2x2x1
jax: 0.10.0
libtpu: 0.0.40
codegen_flags: <defaults>
</compile_context>

<pallas_src>
import jax
import jax.numpy as jnp
from jax.experimental import pallas as pl
from jax.experimental.pallas import tpu as pltpu

LN_EPS = 1e-5                      # torch.nn.LayerNorm default eps
SQRT_2_OVER_PI = 0.7978845608028654


def _gelu(x):
    # tanh-approximation GELU (lowered to the EUP tanh slot).  Replaces the A&S erf
    # polynomial per perf review; ~1e-3 max abs deviation from torch's exact-erf GELU.
    return 0.5 * x * (1.0 + jnp.tanh(SQRT_2_OVER_PI * (x + 0.044715 * x * x * x)))


def _gmlp_net_kernel(vp_in_ref, mask_ref, m1_ref, hm_ref,
                     tl_g_ref, tl_b_ref, tl_w_ref, tl_bias_ref,
                     ln_g_ref, ln_b_ref, w_in_ref, b_in_ref,
                     sgu_g_ref, sgu_b_ref, w_sp_ref, sgu_bias_ref, imp_ref,
                     w_out_ref, b_out_ref,
                     out_ref,
                     vp_scr, rm_scr):
    """One (batch, layer) grid step of the fused encoder; layer L-1 also runs to_logits."""
    li = pl.program_id(1)
    n_layers = pl.num_programs(1)
    N, _ = vp_scr.shape
    E, _, F = rm_scr.shape
    H = w_sp_ref.shape[1]

    m1 = m1_ref[...]                               # (2D, 2D) segment block-average matrix

    # ---- once per batch program: load activations, pre-broadcast mask columns ----
    @pl.when(li == 0)
    def _init():
        vp_scr[...] = vp_in_ref[0]                 # (N, 2D) value|pos lane-stacked
        rm = 1.0 - mask_ref[0]                     # (N, E) rerange_mask (same for all heads)
        for e in range(E):                         # E broadcasts total, reused by every layer
            rm_scr[e] = jnp.broadcast_to(rm[:, e:e + 1], (N, F))

    vp = vp_scr[...]                               # (N, 2D)

    # ---- PreNorm: per-segment LayerNorm via block-averaging matmuls (no lane slicing) ----
    mu = jnp.dot(vp, m1, preferred_element_type=jnp.float32)
    xc = vp - mu
    var = jnp.dot(xc * xc, m1, preferred_element_type=jnp.float32)
    x0 = xc * jax.lax.rsqrt(var + LN_EPS) * ln_g_ref[0] + ln_b_ref[0]

    # ---- proj_in_{value,pos}: block-diagonal (2D, 2F) matmul + GELU ----
    r = _gelu(jnp.dot(x0, w_in_ref[0], preferred_element_type=jnp.float32) + b_in_ref[0])
    res = r[:, :F]                                 # value stream (SGU residual)
    gate = r[:, F:]                                # pos stream (SGU gate)

    # ---- SpatialGatingUnit ----
    gmu = jnp.mean(gate, axis=-1, keepdims=True)
    gc = gate - gmu
    gvar = jnp.mean(gc * gc, axis=-1, keepdims=True)
    gate = gc * jax.lax.rsqrt(gvar + LN_EPS) * sgu_g_ref[0] + sgu_b_ref[0]

    # impute/mask bias, folded into the gate: W@gate + W@mask_bias == W@(gate + mask_bias)
    mb = rm_scr[0] * imp_ref[0, 0]
    for e in range(1, E):
        mb = mb + rm_scr[e] * imp_ref[0, e]
    gp = gate + mb

    # per-head (N,N) spatial mix over the sequence axis, accumulated at full lane width
    # through precomputed 0/1 head-column masks (no dh-wide slices, no concatenates)
    mixed = hm_ref[0] * jnp.dot(w_sp_ref[0, 0], gp, preferred_element_type=jnp.float32)
    for h in range(1, H):
        mixed = mixed + hm_ref[h] * jnp.dot(w_sp_ref[0, h], gp,
                                            preferred_element_type=jnp.float32)
    gate_fin = mixed + sgu_bias_ref[0]             # (N, F)

    sgu_val = _gelu(gate_fin) * res                # act(gate) * res  (act = F.gelu)
    # pos stream out of the SGU is the raw (pre-activation) gate_fin, matching torch.

    # ---- proj_out_{value,pos}: block-diagonal (2F, 2D) matmul + outer Residual ----
    x2 = jnp.concatenate([sgu_val, gate_fin], axis=1)                       # (N, 2F)
    r2 = jnp.dot(x2, w_out_ref[0], preferred_element_type=jnp.float32) + b_out_ref[0]
    vp_scr[...] = vp + r2

    # ---- last layer: to_logits head, packed with value|pos into one lane-dense slab ----
    @pl.when(li == n_layers - 1)
    def _finalize():
        vpf = vp_scr[...]
        mu2 = jnp.dot(vpf, m1, preferred_element_type=jnp.float32)
        xc2 = vpf - mu2
        var2 = jnp.dot(xc2 * xc2, m1, preferred_element_type=jnp.float32)
        hf = xc2 * jax.lax.rsqrt(var2 + LN_EPS) * tl_g_ref[...] + tl_b_ref[...]
        # tl_w rows for the pos segment are zero, so only the value stream feeds logits.
        logits = jnp.dot(hf, tl_w_ref[...], preferred_element_type=jnp.float32) + tl_bias_ref[...]
        out_ref[0] = jnp.concatenate([vpf, logits], axis=1)   # (N, OUT_W), full-width store


def _batch_spec(x):
    n = x.ndim - 1
    return pl.BlockSpec((1,) + x.shape[1:], lambda b, l: (b,) + (0,) * n)


def _layer_spec(x):
    n = x.ndim - 1
    return pl.BlockSpec((1,) + x.shape[1:], lambda b, l: (l,) + (0,) * n)


def _const_spec(x):
    n = x.ndim
    return pl.BlockSpec(x.shape, lambda b, l: (0,) * n)


def gmlp_split_forward(value, pos, x_mask, layer_params, to_logits_params):
    """value/pos: (B, N, D); x_mask: (B, N, E).  Returns (value_out, pos_out, logits)."""
    B, N, D = value.shape
    (ln_g, ln_b, w_in, b_in, sgu_g, sgu_b,
     w_sp, sgu_bias, imp, w_out, b_out) = layer_params
    tl_g, tl_b, tl_w, tl_bias = to_logits_params

    L = ln_g.shape[0]
    F = sgu_g.shape[-1]
    H = w_sp.shape[1]
    c_out = tl_w.shape[-1]
    D2 = 2 * D
    OUT_W = 128 * pl.cdiv(D2 + c_out, 128)         # lane-dense output slab width
    LOG_W = OUT_W - D2

    # ---- host-side layout plumbing only (no compute hoisted out of the kernel) ----
    vp_in = jnp.concatenate([value, pos], axis=-1)                          # (B, N, 2D)
    # segment block-averaging matrix for per-stream LayerNorm stats
    m1 = jnp.kron(jnp.eye(2, dtype=jnp.float32),
                  jnp.full((D, D), 1.0 / D, jnp.float32))                   # (2D, 2D)
    dh = F // H
    head_mask = (jnp.arange(F)[None, :] // dh ==
                 jnp.arange(H)[:, None]).astype(jnp.float32)[:, None, :]    # (H, 1, F)
    # to_logits head padded to the output slab: only value rows / first c_out cols are live
    tl_g_pad = jnp.concatenate([tl_g, jnp.ones((1, D), jnp.float32)], axis=1)
    tl_b_pad = jnp.concatenate([tl_b, jnp.zeros((1, D), jnp.float32)], axis=1)
    tl_w_pad = jnp.zeros((D2, LOG_W), jnp.float32).at[:D, :c_out].set(tl_w)
    tl_bias_pad = jnp.zeros((1, LOG_W), jnp.float32).at[:, :c_out].set(tl_bias)

    in_arrays = (vp_in, x_mask, m1, head_mask,
                 tl_g_pad, tl_b_pad, tl_w_pad, tl_bias_pad,
                 ln_g, ln_b, w_in, b_in, sgu_g, sgu_b,
                 w_sp, sgu_bias, imp, w_out, b_out)
    in_specs = ([_batch_spec(vp_in), _batch_spec(x_mask),
                 _const_spec(m1), _const_spec(head_mask),
                 _const_spec(tl_g_pad), _const_spec(tl_b_pad),
                 _const_spec(tl_w_pad), _const_spec(tl_bias_pad)]
                + [_layer_spec(a) for a in (ln_g, ln_b, w_in, b_in, sgu_g, sgu_b,
                                            w_sp, sgu_bias, imp, w_out, b_out)])

    out = pl.pallas_call(
        _gmlp_net_kernel,
        out_shape=jax.ShapeDtypeStruct((B, N, OUT_W), jnp.float32),
        grid_spec=pltpu.PrefetchScalarGridSpec(
            num_scalar_prefetch=0,
            grid=(B, L),
            in_specs=in_specs,
            out_specs=pl.BlockSpec((1, N, OUT_W), lambda b, l: (b, 0, 0)),
            scratch_shapes=[pltpu.VMEM((N, D2), jnp.float32),       # carried activations
                            pltpu.VMEM((E_FROM(x_mask), N, F), jnp.float32)]),  # mask bcasts
        compiler_params=pltpu.CompilerParams(
            dimension_semantics=("parallel", "arbitrary"),
            vmem_limit_bytes=32 * 1024 * 1024),
    )(*in_arrays)

    value_out = out[..., :D]
    pos_out = out[..., D:D2]
    logits = out[..., D2:D2 + c_out]
    return value_out, pos_out, logits


def E_FROM(x_mask):
    return x_mask.shape[-1]


# --------------- deterministic parameter construction (mirrors module __init__) ---------------

def xavier_uniform(key, fan_in, fan_out):
    limit = (6.0 / (fan_in + fan_out)) ** 0.5
    return jax.random.uniform(key, (fan_in, fan_out), jnp.float32, -limit, limit)


def make_layer_params(key, n_layers, D, F, N, H, E):
    """All e_layers' Residual(PreNorm(gMLPBlock)) params, stacked on a leading layer axis
    and pre-laid-out for the kernel: lane-stacked PreNorm LN params (1, 2D), block-diagonal
    [W_value 0; 0 W_pos] in/out projections, native (H, N, N) spatial weights, compact
    (N, F) SGU bias and (E, N, F) impute table (no batch tiling).  Linear weights (in, out)."""
    dh = F // H
    acc = [[] for _ in range(11)]
    zero_df = jnp.zeros((D, F), jnp.float32)
    zero_fd = jnp.zeros((F, D), jnp.float32)
    for lk in jax.random.split(key, n_layers):
        k = jax.random.split(lk, 6)
        # PreNorm LayerNorms (weight=1, bias=0), value cols then pos cols.
        acc[0].append(jnp.ones((1, 2 * D), jnp.float32))
        acc[1].append(jnp.zeros((1, 2 * D), jnp.float32))
        # proj_in_value | proj_in_pos as a block-diagonal (2D, 2F) matrix.
        acc[2].append(jnp.block([[xavier_uniform(k[0], D, F), zero_df],
                                 [zero_df, xavier_uniform(k[1], D, F)]]))
        acc[3].append(jnp.zeros((1, 2 * F), jnp.float32))
        # SGU LayerNorm.
        acc[4].append(jnp.ones((1, F), jnp.float32))
        acc[5].append(jnp.zeros((1, F), jnp.float32))
        # SGU spatial weight ~ U(-eps, eps), eps = init_eps / dim_seq; kept native (H, N, N).
        eps = 1e-3 / N
        acc[6].append(jax.random.uniform(k[2], (H, N, N), jnp.float32, -eps, eps))
        # SGU bias = ones(heads, dim_seq), laid out as (N, F) with f = h*dh + d.
        bias_hn = jnp.ones((H, N), jnp.float32)
        acc[7].append(jnp.repeat(bias_hn.T, dh, axis=1))
        # impute_bia ~ randn(H, N, E, dh) rearranged to (E, N, F), f = h*dh + d.
        imp = jax.random.normal(k[3], (H, N, E, dh), jnp.float32)
        acc[8].append(jnp.transpose(imp, (2, 1, 0, 3)).reshape(E, N, F))
        # proj_out_value | proj_out_pos as a block-diagonal (2F, 2D) matrix.
        acc[9].append(jnp.block([[xavier_uniform(k[4], F, D), zero_fd],
                                 [zero_fd, xavier_uniform(k[5], F, D)]]))
        acc[10].append(jnp.zeros((1, 2 * D), jnp.float32))
    return tuple(jnp.stack(a, axis=0) for a in acc)


if __name__ == "__main__":
    # Small shapes consistent with the module: batch=2, seq_len=8, enc_in=7,
    # d_model=d_ff=32, n_heads=4, e_layers=2, c_out=7.
    B, N, E = 2, 8, 7
    D, F, H = 32, 32, 4
    e_layers = 2
    c_out = 7

    key = jax.random.PRNGKey(0)
    k_val, k_pos, k_mask, k_par, k_head = jax.random.split(key, 5)

    # Stand-ins for enc_value_embedding / enc_pos_embedding (DataEmbedding not provided).
    value = jax.random.normal(k_val, (B, N, D), jnp.float32)
    pos = jax.random.normal(k_pos, (B, N, D), jnp.float32)
    x_mask = (jax.random.uniform(k_mask, (B, N, E)) > 0.2).astype(jnp.float32)

    layer_params = make_layer_params(k_par, e_layers, D, F, N, H, E)
    # to_logits head (LayerNorm: weight=1, bias=0; Linear: xavier weight, zero bias).
    tl_params = (jnp.ones((1, D), jnp.float32), jnp.zeros((1, D), jnp.float32),
                 xavier_uniform(k_head, D, c_out), jnp.zeros((1, c_out), jnp.float32))

    fwd = jax.jit(gmlp_split_forward)
    v_out, p_out, logits = fwd(value, pos, x_mask, layer_params, tl_params)
    jax.block_until_ready((v_out, p_out, logits))
    print("KERNEL_OK")
</pallas_src>

<mosaic_0001>
module attributes {stable_mosaic.version = 11 : i64} {
  func.func @_gmlp_net_kernel(%arg0: i32, %arg1: i32, %arg2: memref<1x8x64xf32, #tpu.memory_space<vmem>>, %arg3: memref<1x8x7xf32, #tpu.memory_space<vmem>>, %arg4: memref<64x64xf32, #tpu.memory_space<vmem>>, %arg5: memref<4x1x32xf32, #tpu.memory_space<vmem>>, %arg6: memref<1x64xf32, #tpu.memory_space<vmem>>, %arg7: memref<1x64xf32, #tpu.memory_space<vmem>>, %arg8: memref<64x64xf32, #tpu.memory_space<vmem>>, %arg9: memref<1x64xf32, #tpu.memory_space<vmem>>, %arg10: memref<1x1x64xf32, #tpu.memory_space<vmem>>, %arg11: memref<1x1x64xf32, #tpu.memory_space<vmem>>, %arg12: memref<1x64x64xf32, #tpu.memory_space<vmem>>, %arg13: memref<1x1x64xf32, #tpu.memory_space<vmem>>, %arg14: memref<1x1x32xf32, #tpu.memory_space<vmem>>, %arg15: memref<1x1x32xf32, #tpu.memory_space<vmem>>, %arg16: memref<1x4x8x8xf32, #tpu.memory_space<vmem>>, %arg17: memref<1x8x32xf32, #tpu.memory_space<vmem>>, %arg18: memref<1x7x8x32xf32, #tpu.memory_space<vmem>>, %arg19: memref<1x64x64xf32, #tpu.memory_space<vmem>>, %arg20: memref<1x1x64xf32, #tpu.memory_space<vmem>>, %arg21: memref<1x8x128xf32, #tpu.memory_space<vmem>>, %arg22: memref<8x64xf32, #tpu.memory_space<vmem>>, %arg23: memref<7x8x32xf32, #tpu.memory_space<vmem>>) attributes {dimension_semantics = [#tpu.dimension_semantics<parallel>, #tpu.dimension_semantics<arbitrary>], iteration_bounds = array<i64: 2, 2>, scalar_prefetch = 0 : i64, scratch_operands = 2 : i64, tpu.core_type = #tpu.core_type<tc>, window_params = [{transform_indices = @transform_0, window_bounds = array<i64: 1, 8, 64>}, {transform_indices = @transform_1, window_bounds = array<i64: 1, 8, 7>}, {pipeline_mode = #tpu.pipeline_mode<synchronous>, transform_indices = @transform_2, window_bounds = array<i64: 64, 64>}, {pipeline_mode = #tpu.pipeline_mode<synchronous>, transform_indices = @transform_3, window_bounds = array<i64: 4, 1, 32>}, {pipeline_mode = #tpu.pipeline_mode<synchronous>, transform_indices = @transform_4, window_bounds = array<i64: 1, 64>}, {pipeline_mode = #tpu.pipeline_mode<synchronous>, transform_indices = @transform_5, window_bounds = array<i64: 1, 64>}, {pipeline_mode = #tpu.pipeline_mode<synchronous>, transform_indices = @transform_6, window_bounds = array<i64: 64, 64>}, {pipeline_mode = #tpu.pipeline_mode<synchronous>, transform_indices = @transform_7, window_bounds = array<i64: 1, 64>}, {transform_indices = @transform_8, window_bounds = array<i64: 1, 1, 64>}, {transform_indices = @transform_9, window_bounds = array<i64: 1, 1, 64>}, {transform_indices = @transform_10, window_bounds = array<i64: 1, 64, 64>}, {transform_indices = @transform_11, window_bounds = array<i64: 1, 1, 64>}, {transform_indices = @transform_12, window_bounds = array<i64: 1, 1, 32>}, {transform_indices = @transform_13, window_bounds = array<i64: 1, 1, 32>}, {transform_indices = @transform_14, window_bounds = array<i64: 1, 4, 8, 8>}, {transform_indices = @transform_15, window_bounds = array<i64: 1, 8, 32>}, {transform_indices = @transform_16, window_bounds = array<i64: 1, 7, 8, 32>}, {transform_indices = @transform_17, window_bounds = array<i64: 1, 64, 64>}, {transform_indices = @transform_18, window_bounds = array<i64: 1, 1, 64>}, {transform_indices = @transform_19, window_bounds = array<i64: 1, 8, 128>}]} {
    %c0 = arith.constant 0 : index
    %c0_0 = arith.constant 0 : index
    %0 = vector.load %arg4[%c0, %c0_0] : memref<64x64xf32, #tpu.memory_space<vmem>>, vector<64x64xf32>
    %c0_i32 = arith.constant 0 : i32
    %1 = arith.cmpi eq, %arg1, %c0_i32 : i32
    %2 = arith.extui %1 : i1 to i32
    %c0_i32_1 = arith.constant 0 : i32
    %3 = arith.cmpi ne, %2, %c0_i32_1 : i32
    scf.if %3 {
      %c0_126 = arith.constant 0 : index
      %c0_127 = arith.constant 0 : index
      %c0_128 = arith.constant 0 : index
      %170 = vector.load %arg2[%c0_126, %c0_127, %c0_128] : memref<1x8x64xf32, #tpu.memory_space<vmem>>, vector<1x8x64xf32>
      %171 = vector.shape_cast %170 : vector<1x8x64xf32> to vector<8x64xf32>
      %c0_129 = arith.constant 0 : index
      %c0_130 = arith.constant 0 : index
      %172 = vector.load %arg22[%c0_129, %c0_130] : memref<8x64xf32, #tpu.memory_space<vmem>>, vector<8x64xf32>
      tpu.vector_store %arg22[%c0_129, %c0_130], %171 {strides = array<i32>} : memref<8x64xf32, #tpu.memory_space<vmem>>, vector<8x64xf32>,
      %c0_131 = arith.constant 0 : index
      %c0_132 = arith.constant 0 : index
      %c0_133 = arith.constant 0 : index
      %173 = vector.load %arg3[%c0_131, %c0_132, %c0_133] : memref<1x8x7xf32, #tpu.memory_space<vmem>>, vector<1x8x7xf32>
      %174 = vector.shape_cast %173 : vector<1x8x7xf32> to vector<8x7xf32>
      %cst_134 = arith.constant 1.000000e+00 : f32
      %175 = vector.broadcast %cst_134 : f32 to vector<8x7xf32>
      %176 = arith.subf %175, %174 : vector<8x7xf32>
      %177 = vector.extract_strided_slice %176 {offsets = [0, 0], sizes = [8, 1], strides = [1, 1]} : vector<8x7xf32> to vector<8x1xf32>
      %178 = vector.shape_cast %177 : vector<8x1xf32> to vector<8x1xf32>
      %179 = vector.broadcast %178 : vector<8x1xf32> to vector<8x32xf32>
      %c0_135 = arith.constant 0 : index
      %c0_136 = arith.constant 0 : index
      %c0_137 = arith.constant 0 : index
      %180 = vector.load %arg23[%c0_135, %c0_136, %c0_137] : memref<7x8x32xf32, #tpu.memory_space<vmem>>, vector<1x8x32xf32>
      %181 = vector.shape_cast %180 : vector<1x8x32xf32> to vector<8x32xf32>
      %182 = vector.shape_cast %179 : vector<8x32xf32> to vector<1x8x32xf32>
      tpu.vector_store %arg23[%c0_135, %c0_136, %c0_137], %182 {strides = array<i32>} : memref<7x8x32xf32, #tpu.memory_space<vmem>>, vector<1x8x32xf32>,
      %183 = vector.extract_strided_slice %176 {offsets = [0, 1], sizes = [8, 1], strides = [1, 1]} : vector<8x7xf32> to vector<8x1xf32>
      %184 = vector.shape_cast %183 : vector<8x1xf32> to vector<8x1xf32>
      %185 = vector.broadcast %184 : vector<8x1xf32> to vector<8x32xf32>
      %c1_138 = arith.constant 1 : index
      %c0_139 = arith.constant 0 : index
      %c0_140 = arith.constant 0 : index
      %186 = vector.load %arg23[%c1_138, %c0_139, %c0_140] : memref<7x8x32xf32, #tpu.memory_space<vmem>>, vector<1x8x32xf32>
      %187 = vector.shape_cast %186 : vector<1x8x32xf32> to vector<8x32xf32>
      %188 = vector.shape_cast %185 : vector<8x32xf32> to vector<1x8x32xf32>
      tpu.vector_store %arg23[%c1_138, %c0_139, %c0_140], %188 {strides = array<i32>} : memref<7x8x32xf32, #tpu.memory_space<vmem>>, vector<1x8x32xf32>,
      %189 = vector.extract_strided_slice %176 {offsets = [0, 2], sizes = [8, 1], strides = [1, 1]} : vector<8x7xf32> to vector<8x1xf32>
      %190 = vector.shape_cast %189 : vector<8x1xf32> to vector<8x1xf32>
      %191 = vector.broadcast %190 : vector<8x1xf32> to vector<8x32xf32>
      %c2_141 = arith.constant 2 : index
      %c0_142 = arith.constant 0 : index
      %c0_143 = arith.constant 0 : index
      %192 = vector.load %arg23[%c2_141, %c0_142, %c0_143] : memref<7x8x32xf32, #tpu.memory_space<vmem>>, vector<1x8x32xf32>
      %193 = vector.shape_cast %192 : vector<1x8x32xf32> to vector<8x32xf32>
      %194 = vector.shape_cast %191 : vector<8x32xf32> to vector<1x8x32xf32>
      tpu.vector_store %arg23[%c2_141, %c0_142, %c0_143], %194 {strides = array<i32>} : memref<7x8x32xf32, #tpu.memory_space<vmem>>, vector<1x8x32xf32>,
      %195 = vector.extract_strided_slice %176 {offsets = [0, 3], sizes = [8, 1], strides = [1, 1]} : vector<8x7xf32> to vector<8x1xf32>
      %196 = vector.shape_cast %195 : vector<8x1xf32> to vector<8x1xf32>
      %197 = vector.broadcast %196 : vector<8x1xf32> to vector<8x32xf32>
      %c3_144 = arith.constant 3 : index
      %c0_145 = arith.constant 0 : index
      %c0_146 = arith.constant 0 : index
      %198 = vector.load %arg23[%c3_144, %c0_145, %c0_146] : memref<7x8x32xf32, #tpu.memory_space<vmem>>, vector<1x8x32xf32>
      %199 = vector.shape_cast %198 : vector<1x8x32xf32> to vector<8x32xf32>
      %200 = vector.shape_cast %197 : vector<8x32xf32> to vector<1x8x32xf32>
      tpu.vector_store %arg23[%c3_144, %c0_145, %c0_146], %200 {strides = array<i32>} : memref<7x8x32xf32, #tpu.memory_space<vmem>>, vector<1x8x32xf32>,
      %201 = vector.extract_strided_slice %176 {offsets = [0, 4], sizes = [8, 1], strides = [1, 1]} : vector<8x7xf32> to vector<8x1xf32>
      %202 = vector.shape_cast %201 : vector<8x1xf32> to vector<8x1xf32>
      %203 = vector.broadcast %202 : vector<8x1xf32> to vector<8x32xf32>
      %c4_147 = arith.constant 4 : index
      %c0_148 = arith.constant 0 : index
      %c0_149 = arith.constant 0 : index
      %204 = vector.load %arg23[%c4_147, %c0_148, %c0_149] : memref<7x8x32xf32, #tpu.memory_space<vmem>>, vector<1x8x32xf32>
      %205 = vector.shape_cast %204 : vector<1x8x32xf32> to vector<8x32xf32>
      %206 = vector.shape_cast %203 : vector<8x32xf32> to vector<1x8x32xf32>
      tpu.vector_store %arg23[%c4_147, %c0_148, %c0_149], %206 {strides = array<i32>} : memref<7x8x32xf32, #tpu.memory_space<vmem>>, vector<1x8x32xf32>,
      %207 = vector.extract_strided_slice %176 {offsets = [0, 5], sizes = [8, 1], strides = [1, 1]} : vector<8x7xf32> to vector<8x1xf32>
      %208 = vector.shape_cast %207 : vector<8x1xf32> to vector<8x1xf32>
      %209 = vector.broadcast %208 : vector<8x1xf32> to vector<8x32xf32>
      %c5_150 = arith.constant 5 : index
      %c0_151 = arith.constant 0 : index
      %c0_152 = arith.constant 0 : index
      %210 = vector.load %arg23[%c5_150, %c0_151, %c0_152] : memref<7x8x32xf32, #tpu.memory_space<vmem>>, vector<1x8x32xf32>
      %211 = vector.shape_cast %210 : vector<1x8x32xf32> to vector<8x32xf32>
      %212 = vector.shape_cast %209 : vector<8x32xf32> to vector<1x8x32xf32>
      tpu.vector_store %arg23[%c5_150, %c0_151, %c0_152], %212 {strides = array<i32>} : memref<7x8x32xf32, #tpu.memory_space<vmem>>, vector<1x8x32xf32>,
      %213 = vector.extract_strided_slice %176 {offsets = [0, 6], sizes = [8, 1], strides = [1, 1]} : vector<8x7xf32> to vector<8x1xf32>
      %214 = vector.shape_cast %213 : vector<8x1xf32> to vector<8x1xf32>
      %215 = vector.broadcast %214 : vector<8x1xf32> to vector<8x32xf32>
      %c6_153 = arith.constant 6 : index
      %c0_154 = arith.constant 0 : index
      %c0_155 = arith.constant 0 : index
      %216 = vector.load %arg23[%c6_153, %c0_154, %c0_155] : memref<7x8x32xf32, #tpu.memory_space<vmem>>, vector<1x8x32xf32>
      %217 = vector.shape_cast %216 : vector<1x8x32xf32> to vector<8x32xf32>
      %218 = vector.shape_cast %215 : vector<8x32xf32> to vector<1x8x32xf32>
      tpu.vector_store %arg23[%c6_153, %c0_154, %c0_155], %218 {strides = array<i32>} : memref<7x8x32xf32, #tpu.memory_space<vmem>>, vector<1x8x32xf32>,
    } else {
    }
    %c0_2 = arith.constant 0 : index
    %c0_3 = arith.constant 0 : index
    %4 = vector.load %arg22[%c0_2, %c0_3] : memref<8x64xf32, #tpu.memory_space<vmem>>, vector<8x64xf32>
    %cst = arith.constant dense<0.000000e+00> : vector<8x64xf32>
    %5 = tpu.matmul %4, %0, %cst {dimension_numbers = #tpu.dot_dimension_numbers<[1], [0], [0], [1], [0, 0, 1, 1], [], []>} : vector<8x64xf32>, vector<64x64xf32>, vector<8x64xf32> -> vector<8x64xf32>
    %6 = arith.subf %4, %5 : vector<8x64xf32>
    %7 = arith.mulf %6, %6 : vector<8x64xf32>
    %cst_4 = arith.constant dense<0.000000e+00> : vector<8x64xf32>
    %8 = tpu.matmul %7, %0, %cst_4 {dimension_numbers = #tpu.dot_dimension_numbers<[1], [0], [0], [1], [0, 0, 1, 1], [], []>} : vector<8x64xf32>, vector<64x64xf32>, vector<8x64xf32> -> vector<8x64xf32>
    %cst_5 = arith.constant 9.99999974E-6 : f32
    %9 = vector.broadcast %cst_5 : f32 to vector<8x64xf32>
    %10 = arith.addf %8, %9 : vector<8x64xf32>
    %11 = math.rsqrt %10 : vector<8x64xf32>
    %12 = arith.mulf %6, %11 : vector<8x64xf32>
    %c0_6 = arith.constant 0 : index
    %c0_7 = arith.constant 0 : index
    %c0_8 = arith.constant 0 : index
    %13 = vector.load %arg10[%c0_6, %c0_7, %c0_8] : memref<1x1x64xf32, #tpu.memory_space<vmem>>, vector<1x1x64xf32>
    %14 = vector.shape_cast %13 : vector<1x1x64xf32> to vector<1x64xf32>
    %15 = vector.broadcast %14 : vector<1x64xf32> to vector<8x64xf32>
    %16 = arith.mulf %12, %15 : vector<8x64xf32>
    %c0_9 = arith.constant 0 : index
    %c0_10 = arith.constant 0 : index
    %c0_11 = arith.constant 0 : index
    %17 = vector.load %arg11[%c0_9, %c0_10, %c0_11] : memref<1x1x64xf32, #tpu.memory_space<vmem>>, vector<1x1x64xf32>
    %18 = vector.shape_cast %17 : vector<1x1x64xf32> to vector<1x64xf32>
    %19 = vector.broadcast %18 : vector<1x64xf32> to vector<8x64xf32>
    %20 = arith.addf %16, %19 : vector<8x64xf32>
    %c0_12 = arith.constant 0 : index
    %c0_13 = arith.constant 0 : index
    %c0_14 = arith.constant 0 : index
    %21 = vector.load %arg12[%c0_12, %c0_13, %c0_14] : memref<1x64x64xf32, #tpu.memory_space<vmem>>, vector<1x64x64xf32>
    %22 = vector.shape_cast %21 : vector<1x64x64xf32> to vector<64x64xf32>
    %cst_15 = arith.constant dense<0.000000e+00> : vector<8x64xf32>
    %23 = tpu.matmul %20, %22, %cst_15 {dimension_numbers = #tpu.dot_dimension_numbers<[1], [0], [0], [1], [0, 0, 1, 1], [], []>} : vector<8x64xf32>, vector<64x64xf32>, vector<8x64xf32> -> vector<8x64xf32>
    %c0_16 = arith.constant 0 : index
    %c0_17 = arith.constant 0 : index
    %c0_18 = arith.constant 0 : index
    %24 = vector.load %arg13[%c0_16, %c0_17, %c0_18] : memref<1x1x64xf32, #tpu.memory_space<vmem>>, vector<1x1x64xf32>
    %25 = vector.shape_cast %24 : vector<1x1x64xf32> to vector<1x64xf32>
    %26 = vector.broadcast %25 : vector<1x64xf32> to vector<8x64xf32>
    %27 = arith.addf %23, %26 : vector<8x64xf32>
    %cst_19 = arith.constant 5.000000e-01 : f32
    %28 = vector.broadcast %cst_19 : f32 to vector<8x64xf32>
    %29 = arith.mulf %28, %27 : vector<8x64xf32>
    %cst_20 = arith.constant 4.471500e-02 : f32
    %30 = vector.broadcast %cst_20 : f32 to vector<8x64xf32>
    %31 = arith.mulf %30, %27 : vector<8x64xf32>
    %32 = arith.mulf %31, %27 : vector<8x64xf32>
    %33 = arith.mulf %32, %27 : vector<8x64xf32>
    %34 = arith.addf %27, %33 : vector<8x64xf32>
    %cst_21 = arith.constant 0.797884583 : f32
    %35 = vector.broadcast %cst_21 : f32 to vector<8x64xf32>
    %36 = arith.mulf %35, %34 : vector<8x64xf32>
    %37 = math.tanh %36 : vector<8x64xf32>
    %cst_22 = arith.constant 1.000000e+00 : f32
    %38 = vector.broadcast %cst_22 : f32 to vector<8x64xf32>
    %39 = arith.addf %38, %37 : vector<8x64xf32>
    %40 = arith.mulf %29, %39 : vector<8x64xf32>
    %41 = vector.extract_strided_slice %40 {offsets = [0, 0], sizes = [8, 32], strides = [1, 1]} : vector<8x64xf32> to vector<8x32xf32>
    %42 = vector.extract_strided_slice %40 {offsets = [0, 32], sizes = [8, 32], strides = [1, 1]} : vector<8x64xf32> to vector<8x32xf32>
    %cst_23 = arith.constant dense<0.000000e+00> : vector<8xf32>
    %43 = vector.multi_reduction <add>, %42, %cst_23 [1] : vector<8x32xf32> to vector<8xf32>
    %44 = vector.shape_cast %43 : vector<8xf32> to vector<8x1xf32>
    %cst_24 = arith.constant 3.200000e+01 : f32
    %45 = vector.broadcast %cst_24 : f32 to vector<8x1xf32>
    %46 = arith.divf %44, %45 : vector<8x1xf32>
    %47 = vector.broadcast %46 : vector<8x1xf32> to vector<8x32xf32>
    %48 = arith.subf %42, %47 : vector<8x32xf32>
    %49 = arith.mulf %48, %48 : vector<8x32xf32>
    %cst_25 = arith.constant dense<0.000000e+00> : vector<8xf32>
    %50 = vector.multi_reduction <add>, %49, %cst_25 [1] : vector<8x32xf32> to vector<8xf32>
    %51 = vector.shape_cast %50 : vector<8xf32> to vector<8x1xf32>
    %cst_26 = arith.constant 3.200000e+01 : f32
    %52 = vector.broadcast %cst_26 : f32 to vector<8x1xf32>
    %53 = arith.divf %51, %52 : vector<8x1xf32>
    %cst_27 = arith.constant 9.99999974E-6 : f32
    %54 = vector.broadcast %cst_27 : f32 to vector<8x1xf32>
    %55 = arith.addf %53, %54 : vector<8x1xf32>
    %56 = math.rsqrt %55 : vector<8x1xf32>
    %57 = vector.broadcast %56 : vector<8x1xf32> to vector<8x32xf32>
    %58 = arith.mulf %48, %57 : vector<8x32xf32>
    %c0_28 = arith.constant 0 : index
    %c0_29 = arith.constant 0 : index
    %c0_30 = arith.constant 0 : index
    %59 = vector.load %arg14[%c0_28, %c0_29, %c0_30] : memref<1x1x32xf32, #tpu.memory_space<vmem>>, vector<1x1x32xf32>
    %60 = vector.shape_cast %59 : vector<1x1x32xf32> to vector<1x32xf32>
    %61 = vector.broadcast %60 : vector<1x32xf32> to vector<8x32xf32>
    %62 = arith.mulf %58, %61 : vector<8x32xf32>
    %c0_31 = arith.constant 0 : index
    %c0_32 = arith.constant 0 : index
    %c0_33 = arith.constant 0 : index
    %63 = vector.load %arg15[%c0_31, %c0_32, %c0_33] : memref<1x1x32xf32, #tpu.memory_space<vmem>>, vector<1x1x32xf32>
    %64 = vector.shape_cast %63 : vector<1x1x32xf32> to vector<1x32xf32>
    %65 = vector.broadcast %64 : vector<1x32xf32> to vector<8x32xf32>
    %66 = arith.addf %62, %65 : vector<8x32xf32>
    %c0_34 = arith.constant 0 : index
    %c0_35 = arith.constant 0 : index
    %c0_36 = arith.constant 0 : index
    %67 = vector.load %arg23[%c0_34, %c0_35, %c0_36] : memref<7x8x32xf32, #tpu.memory_space<vmem>>, vector<1x8x32xf32>
    %68 = vector.shape_cast %67 : vector<1x8x32xf32> to vector<8x32xf32>
    %c0_37 = arith.constant 0 : index
    %c0_38 = arith.constant 0 : index
    %c0_39 = arith.constant 0 : index
    %c0_40 = arith.constant 0 : index
    %69 = vector.load %arg18[%c0_37, %c0_38, %c0_39, %c0_40] : memref<1x7x8x32xf32, #tpu.memory_space<vmem>>, vector<1x1x8x32xf32>
    %70 = vector.shape_cast %69 : vector<1x1x8x32xf32> to vector<8x32xf32>
    %71 = arith.mulf %68, %70 : vector<8x32xf32>
    %c1 = arith.constant 1 : index
    %c0_41 = arith.constant 0 : index
    %c0_42 = arith.constant 0 : index
    %72 = vector.load %arg23[%c1, %c0_41, %c0_42] : memref<7x8x32xf32, #tpu.memory_space<vmem>>, vector<1x8x32xf32>
    %73 = vector.shape_cast %72 : vector<1x8x32xf32> to vector<8x32xf32>
    %c0_43 = arith.constant 0 : index
    %c1_44 = arith.constant 1 : index
    %c0_45 = arith.constant 0 : index
    %c0_46 = arith.constant 0 : index
    %74 = vector.load %arg18[%c0_43, %c1_44, %c0_45, %c0_46] : memref<1x7x8x32xf32, #tpu.memory_space<vmem>>, vector<1x1x8x32xf32>
    %75 = vector.shape_cast %74 : vector<1x1x8x32xf32> to vector<8x32xf32>
    %76 = arith.mulf %73, %75 : vector<8x32xf32>
    %77 = arith.addf %71, %76 : vector<8x32xf32>
    %c2 = arith.constant 2 : index
    %c0_47 = arith.constant 0 : index
    %c0_48 = arith.constant 0 : index
    %78 = vector.load %arg23[%c2, %c0_47, %c0_48] : memref<7x8x32xf32, #tpu.memory_space<vmem>>, vector<1x8x32xf32>
    %79 = vector.shape_cast %78 : vector<1x8x32xf32> to vector<8x32xf32>
    %c0_49 = arith.constant 0 : index
    %c2_50 = arith.constant 2 : index
    %c0_51 = arith.constant 0 : index
    %c0_52 = arith.constant 0 : index
    %80 = vector.load %arg18[%c0_49, %c2_50, %c0_51, %c0_52] : memref<1x7x8x32xf32, #tpu.memory_space<vmem>>, vector<1x1x8x32xf32>
    %81 = vector.shape_cast %80 : vector<1x1x8x32xf32> to vector<8x32xf32>
    %82 = arith.mulf %79, %81 : vector<8x32xf32>
    %83 = arith.addf %77, %82 : vector<8x32xf32>
    %c3 = arith.constant 3 : index
    %c0_53 = arith.constant 0 : index
    %c0_54 = arith.constant 0 : index
    %84 = vector.load %arg23[%c3, %c0_53, %c0_54] : memref<7x8x32xf32, #tpu.memory_space<vmem>>, vector<1x8x32xf32>
    %85 = vector.shape_cast %84 : vector<1x8x32xf32> to vector<8x32xf32>
    %c0_55 = arith.constant 0 : index
    %c3_56 = arith.constant 3 : index
    %c0_57 = arith.constant 0 : index
    %c0_58 = arith.constant 0 : index
    %86 = vector.load %arg18[%c0_55, %c3_56, %c0_57, %c0_58] : memref<1x7x8x32xf32, #tpu.memory_space<vmem>>, vector<1x1x8x32xf32>
    %87 = vector.shape_cast %86 : vector<1x1x8x32xf32> to vector<8x32xf32>
    %88 = arith.mulf %85, %87 : vector<8x32xf32>
    %89 = arith.addf %83, %88 : vector<8x32xf32>
    %c4 = arith.constant 4 : index
    %c0_59 = arith.constant 0 : index
    %c0_60 = arith.constant 0 : index
    %90 = vector.load %arg23[%c4, %c0_59, %c0_60] : memref<7x8x32xf32, #tpu.memory_space<vmem>>, vector<1x8x32xf32>
    %91 = vector.shape_cast %90 : vector<1x8x32xf32> to vector<8x32xf32>
    %c0_61 = arith.constant 0 : index
    %c4_62 = arith.constant 4 : index
    %c0_63 = arith.constant 0 : index
    %c0_64 = arith.constant 0 : index
    %92 = vector.load %arg18[%c0_61, %c4_62, %c0_63, %c0_64] : memref<1x7x8x32xf32, #tpu.memory_space<vmem>>, vector<1x1x8x32xf32>
    %93 = vector.shape_cast %92 : vector<1x1x8x32xf32> to vector<8x32xf32>
    %94 = arith.mulf %91, %93 : vector<8x32xf32>
    %95 = arith.addf %89, %94 : vector<8x32xf32>
    %c5 = arith.constant 5 : index
    %c0_65 = arith.constant 0 : index
    %c0_66 = arith.constant 0 : index
    %96 = vector.load %arg23[%c5, %c0_65, %c0_66] : memref<7x8x32xf32, #tpu.memory_space<vmem>>, vector<1x8x32xf32>
    %97 = vector.shape_cast %96 : vector<1x8x32xf32> to vector<8x32xf32>
    %c0_67 = arith.constant 0 : index
    %c5_68 = arith.constant 5 : index
    %c0_69 = arith.constant 0 : index
    %c0_70 = arith.constant 0 : index
    %98 = vector.load %arg18[%c0_67, %c5_68, %c0_69, %c0_70] : memref<1x7x8x32xf32, #tpu.memory_space<vmem>>, vector<1x1x8x32xf32>
    %99 = vector.shape_cast %98 : vector<1x1x8x32xf32> to vector<8x32xf32>
    %100 = arith.mulf %97, %99 : vector<8x32xf32>
    %101 = arith.addf %95, %100 : vector<8x32xf32>
    %c6 = arith.constant 6 : index
    %c0_71 = arith.constant 0 : index
    %c0_72 = arith.constant 0 : index
    %102 = vector.load %arg23[%c6, %c0_71, %c0_72] : memref<7x8x32xf32, #tpu.memory_space<vmem>>, vector<1x8x32xf32>
    %103 = vector.shape_cast %102 : vector<1x8x32xf32> to vector<8x32xf32>
    %c0_73 = arith.constant 0 : index
    %c6_74 = arith.constant 6 : index
    %c0_75 = arith.constant 0 : index
    %c0_76 = arith.constant 0 : index
    %104 = vector.load %arg18[%c0_73, %c6_74, %c0_75, %c0_76] : memref<1x7x8x32xf32, #tpu.memory_space<vmem>>, vector<1x1x8x32xf32>
    %105 = vector.shape_cast %104 : vector<1x1x8x32xf32> to vector<8x32xf32>
    %106 = arith.mulf %103, %105 : vector<8x32xf32>
    %107 = arith.addf %101, %106 : vector<8x32xf32>
    %108 = arith.addf %66, %107 : vector<8x32xf32>
    %c0_77 = arith.constant 0 : index
    %c0_78 = arith.constant 0 : index
    %c0_79 = arith.constant 0 : index
    %109 = vector.load %arg5[%c0_77, %c0_78, %c0_79] : memref<4x1x32xf32, #tpu.memory_space<vmem>>, vector<1x1x32xf32>
    %110 = vector.shape_cast %109 : vector<1x1x32xf32> to vector<1x32xf32>
    %c0_80 = arith.constant 0 : index
    %c0_81 = arith.constant 0 : index
    %c0_82 = arith.constant 0 : index
    %c0_83 = arith.constant 0 : index
    %111 = vector.load %arg16[%c0_80, %c0_81, %c0_82, %c0_83] : memref<1x4x8x8xf32, #tpu.memory_space<vmem>>, vector<1x1x8x8xf32>
    %112 = vector.shape_cast %111 : vector<1x1x8x8xf32> to vector<8x8xf32>
    %cst_84 = arith.constant dense<0.000000e+00> : vector<8x32xf32>
    %113 = tpu.matmul %112, %108, %cst_84 {dimension_numbers = #tpu.dot_dimension_numbers<[1], [0], [0], [1], [0, 0, 1, 1], [], []>} : vector<8x8xf32>, vector<8x32xf32>, vector<8x32xf32> -> vector<8x32xf32>
    %114 = vector.broadcast %110 : vector<1x32xf32> to vector<8x32xf32>
    %115 = arith.mulf %114, %113 : vector<8x32xf32>
    %c1_85 = arith.constant 1 : index
    %c0_86 = arith.constant 0 : index
    %c0_87 = arith.constant 0 : index
    %116 = vector.load %arg5[%c1_85, %c0_86, %c0_87] : memref<4x1x32xf32, #tpu.memory_space<vmem>>, vector<1x1x32xf32>
    %117 = vector.shape_cast %116 : vector<1x1x32xf32> to vector<1x32xf32>
    %c0_88 = arith.constant 0 : index
    %c1_89 = arith.constant 1 : index
    %c0_90 = arith.constant 0 : index
    %c0_91 = arith.constant 0 : index
    %118 = vector.load %arg16[%c0_88, %c1_89, %c0_90, %c0_91] : memref<1x4x8x8xf32, #tpu.memory_space<vmem>>, vector<1x1x8x8xf32>
    %119 = vector.shape_cast %118 : vector<1x1x8x8xf32> to vector<8x8xf32>
    %cst_92 = arith.constant dense<0.000000e+00> : vector<8x32xf32>
    %120 = tpu.matmul %119, %108, %cst_92 {dimension_numbers = #tpu.dot_dimension_numbers<[1], [0], [0], [1], [0, 0, 1, 1], [], []>} : vector<8x8xf32>, vector<8x32xf32>, vector<8x32xf32> -> vector<8x32xf32>
    %121 = vector.broadcast %117 : vector<1x32xf32> to vector<8x32xf32>
    %122 = arith.mulf %121, %120 : vector<8x32xf32>
    %123 = arith.addf %115, %122 : vector<8x32xf32>
    %c2_93 = arith.constant 2 : index
    %c0_94 = arith.constant 0 : index
    %c0_95 = arith.constant 0 : index
    %124 = vector.load %arg5[%c2_93, %c0_94, %c0_95] : memref<4x1x32xf32, #tpu.memory_space<vmem>>, vector<1x1x32xf32>
    %125 = vector.shape_cast %124 : vector<1x1x32xf32> to vector<1x32xf32>
    %c0_96 = arith.constant 0 : index
    %c2_97 = arith.constant 2 : index
    %c0_98 = arith.constant 0 : index
    %c0_99 = arith.constant 0 : index
    %126 = vector.load %arg16[%c0_96, %c2_97, %c0_98, %c0_99] : memref<1x4x8x8xf32, #tpu.memory_space<vmem>>, vector<1x1x8x8xf32>
    %127 = vector.shape_cast %126 : vector<1x1x8x8xf32> to vector<8x8xf32>
    %cst_100 = arith.constant dense<0.000000e+00> : vector<8x32xf32>
    %128 = tpu.matmul %127, %108, %cst_100 {dimension_numbers = #tpu.dot_dimension_numbers<[1], [0], [0], [1], [0, 0, 1, 1], [], []>} : vector<8x8xf32>, vector<8x32xf32>, vector<8x32xf32> -> vector<8x32xf32>
    %129 = vector.broadcast %125 : vector<1x32xf32> to vector<8x32xf32>
    %130 = arith.mulf %129, %128 : vector<8x32xf32>
    %131 = arith.addf %123, %130 : vector<8x32xf32>
    %c3_101 = arith.constant 3 : index
    %c0_102 = arith.constant 0 : index
    %c0_103 = arith.constant 0 : index
    %132 = vector.load %arg5[%c3_101, %c0_102, %c0_103] : memref<4x1x32xf32, #tpu.memory_space<vmem>>, vector<1x1x32xf32>
    %133 = vector.shape_cast %132 : vector<1x1x32xf32> to vector<1x32xf32>
    %c0_104 = arith.constant 0 : index
    %c3_105 = arith.constant 3 : index
    %c0_106 = arith.constant 0 : index
    %c0_107 = arith.constant 0 : index
    %134 = vector.load %arg16[%c0_104, %c3_105, %c0_106, %c0_107] : memref<1x4x8x8xf32, #tpu.memory_space<vmem>>, vector<1x1x8x8xf32>
    %135 = vector.shape_cast %134 : vector<1x1x8x8xf32> to vector<8x8xf32>
    %cst_108 = arith.constant dense<0.000000e+00> : vector<8x32xf32>
    %136 = tpu.matmul %135, %108, %cst_108 {dimension_numbers = #tpu.dot_dimension_numbers<[1], [0], [0], [1], [0, 0, 1, 1], [], []>} : vector<8x8xf32>, vector<8x32xf32>, vector<8x32xf32> -> vector<8x32xf32>
    %137 = vector.broadcast %133 : vector<1x32xf32> to vector<8x32xf32>
    %138 = arith.mulf %137, %136 : vector<8x32xf32>
    %139 = arith.addf %131, %138 : vector<8x32xf32>
    %c0_109 = arith.constant 0 : index
    %c0_110 = arith.constant 0 : index
    %c0_111 = arith.constant 0 : index
    %140 = vector.load %arg17[%c0_109, %c0_110, %c0_111] : memref<1x8x32xf32, #tpu.memory_space<vmem>>, vector<1x8x32xf32>
    %141 = vector.shape_cast %140 : vector<1x8x32xf32> to vector<8x32xf32>
    %142 = arith.addf %139, %141 : vector<8x32xf32>
    %cst_112 = arith.constant 5.000000e-01 : f32
    %143 = vector.broadcast %cst_112 : f32 to vector<8x32xf32>
    %144 = arith.mulf %143, %142 : vector<8x32xf32>
    %cst_113 = arith.constant 4.471500e-02 : f32
    %145 = vector.broadcast %cst_113 : f32 to vector<8x32xf32>
    %146 = arith.mulf %145, %142 : vector<8x32xf32>
    %147 = arith.mulf %146, %142 : vector<8x32xf32>
    %148 = arith.mulf %147, %142 : vector<8x32xf32>
    %149 = arith.addf %142, %148 : vector<8x32xf32>
    %cst_114 = arith.constant 0.797884583 : f32
    %150 = vector.broadcast %cst_114 : f32 to vector<8x32xf32>
    %151 = arith.mulf %150, %149 : vector<8x32xf32>
    %152 = math.tanh %151 : vector<8x32xf32>
    %cst_115 = arith.constant 1.000000e+00 : f32
    %153 = vector.broadcast %cst_115 : f32 to vector<8x32xf32>
    %154 = arith.addf %153, %152 : vector<8x32xf32>
    %155 = arith.mulf %144, %154 : vector<8x32xf32>
    %156 = arith.mulf %155, %41 : vector<8x32xf32>
    %157 = tpu.concatenate %156, %142 in 1 : vector<8x32xf32>, vector<8x32xf32> -> vector<8x64xf32>
    %c0_116 = arith.constant 0 : index
    %c0_117 = arith.constant 0 : index
    %c0_118 = arith.constant 0 : index
    %158 = vector.load %arg19[%c0_116, %c0_117, %c0_118] : memref<1x64x64xf32, #tpu.memory_space<vmem>>, vector<1x64x64xf32>
    %159 = vector.shape_cast %158 : vector<1x64x64xf32> to vector<64x64xf32>
    %cst_119 = arith.constant dense<0.000000e+00> : vector<8x64xf32>
    %160 = tpu.matmul %157, %159, %cst_119 {dimension_numbers = #tpu.dot_dimension_numbers<[1], [0], [0], [1], [0, 0, 1, 1], [], []>} : vector<8x64xf32>, vector<64x64xf32>, vector<8x64xf32> -> vector<8x64xf32>
    %c0_120 = arith.constant 0 : index
    %c0_121 = arith.constant 0 : index
    %c0_122 = arith.constant 0 : index
    %161 = vector.load %arg20[%c0_120, %c0_121, %c0_122] : memref<1x1x64xf32, #tpu.memory_space<vmem>>, vector<1x1x64xf32>
    %162 = vector.shape_cast %161 : vector<1x1x64xf32> to vector<1x64xf32>
    %163 = vector.broadcast %162 : vector<1x64xf32> to vector<8x64xf32>
    %164 = arith.addf %160, %163 : vector<8x64xf32>
    %165 = arith.addf %4, %164 : vector<8x64xf32>
    %c0_123 = arith.constant 0 : index
    %c0_124 = arith.constant 0 : index
    %166 = vector.load %arg22[%c0_123, %c0_124] : memref<8x64xf32, #tpu.memory_space<vmem>>, vector<8x64xf32>
    tpu.vector_store %arg22[%c0_123, %c0_124], %165 {strides = array<i32>} : memref<8x64xf32, #tpu.memory_space<vmem>>, vector<8x64xf32>,
    %c1_i32 = arith.constant 1 : i32
    %167 = arith.cmpi eq, %arg1, %c1_i32 : i32
    %168 = arith.extui %167 : i1 to i32
    %c0_i32_125 = arith.constant 0 : i32
    %169 = arith.cmpi ne, %168, %c0_i32_125 : i32
    scf.if %169 {
      %c0_126 = arith.constant 0 : index
      %c0_127 = arith.constant 0 : index
      %170 = vector.load %arg22[%c0_126, %c0_127] : memref<8x64xf32, #tpu.memory_space<vmem>>, vector<8x64xf32>
      %cst_128 = arith.constant dense<0.000000e+00> : vector<8x64xf32>
      %171 = tpu.matmul %170, %0, %cst_128 {dimension_numbers = #tpu.dot_dimension_numbers<[1], [0], [0], [1], [0, 0, 1, 1], [], []>} : vector<8x64xf32>, vector<64x64xf32>, vector<8x64xf32> -> vector<8x64xf32>
      %172 = arith.subf %170, %171 : vector<8x64xf32>
      %173 = arith.mulf %172, %172 : vector<8x64xf32>
      %cst_129 = arith.constant dense<0.000000e+00> : vector<8x64xf32>
      %174 = tpu.matmul %173, %0, %cst_129 {dimension_numbers = #tpu.dot_dimension_numbers<[1], [0], [0], [1], [0, 0, 1, 1], [], []>} : vector<8x64xf32>, vector<64x64xf32>, vector<8x64xf32> -> vector<8x64xf32>
      %cst_130 = arith.constant 9.99999974E-6 : f32
      %175 = vector.broadcast %cst_130 : f32 to vector<8x64xf32>
      %176 = arith.addf %174, %175 : vector<8x64xf32>
      %177 = math.rsqrt %176 : vector<8x64xf32>
      %178 = arith.mulf %172, %177 : vector<8x64xf32>
      %c0_131 = arith.constant 0 : index
      %c0_132 = arith.constant 0 : index
      %179 = vector.load %arg6[%c0_131, %c0_132] : memref<1x64xf32, #tpu.memory_space<vmem>>, vector<1x64xf32>
      %180 = vector.broadcast %179 : vector<1x64xf32> to vector<8x64xf32>
      %181 = arith.mulf %178, %180 : vector<8x64xf32>
      %c0_133 = arith.constant 0 : index
      %c0_134 = arith.constant 0 : index
      %182 = vector.load %arg7[%c0_133, %c0_134] : memref<1x64xf32, #tpu.memory_space<vmem>>, vector<1x64xf32>
      %183 = vector.broadcast %182 : vector<1x64xf32> to vector<8x64xf32>
      %184 = arith.addf %181, %183 : vector<8x64xf32>
      %c0_135 = arith.constant 0 : index
      %c0_136 = arith.constant 0 : index
      %185 = vector.load %arg8[%c0_135, %c0_136] : memref<64x64xf32, #tpu.memory_space<vmem>>, vector<64x64xf32>
      %cst_137 = arith.constant dense<0.000000e+00> : vector<8x64xf32>
      %186 = tpu.matmul %184, %185, %cst_137 {dimension_numbers = #tpu.dot_dimension_numbers<[1], [0], [0], [1], [0, 0, 1, 1], [], []>} : vector<8x64xf32>, vector<64x64xf32>, vector<8x64xf32> -> vector<8x64xf32>
      %c0_138 = arith.constant 0 : index
      %c0_139 = arith.constant 0 : index
      %187 = vector.load %arg9[%c0_138, %c0_139] : memref<1x64xf32, #tpu.memory_space<vmem>>, vector<1x64xf32>
      %188 = vector.broadcast %187 : vector<1x64xf32> to vector<8x64xf32>
      %189 = arith.addf %186, %188 : vector<8x64xf32>
      %190 = tpu.concatenate %170, %189 in 1 : vector<8x64xf32>, vector<8x64xf32> -> vector<8x128xf32>
      %c0_140 = arith.constant 0 : index
      %c0_141 = arith.constant 0 : index
      %c0_142 = arith.constant 0 : index
      %191 = vector.load %arg21[%c0_140, %c0_141, %c0_142] : memref<1x8x128xf32, #tpu.memory_space<vmem>>, vector<1x8x128xf32>
      %192 = vector.shape_cast %191 : vector<1x8x128xf32> to vector<8x128xf32>
      %193 = vector.shape_cast %190 : vector<8x128xf32> to vector<1x8x128xf32>
      tpu.vector_store %arg21[%c0_140, %c0_141, %c0_142], %193 {strides = array<i32>} : memref<1x8x128xf32, #tpu.memory_space<vmem>>, vector<1x8x128xf32>,
    } else {
    }
    return
  }
  func.func @transform_0(%arg0: i32, %arg1: i32) -> (i32, i32, i32) {
    %c0_i32 = arith.constant 0 : i32
    %c0_i32_0 = arith.constant 0 : i32
    %c0_i32_1 = arith.constant 0 : i32
    return %arg0, %c0_i32, %c0_i32_0 : i32, i32, i32
  }
  func.func @transform_1(%arg0: i32, %arg1: i32) -> (i32, i32, i32) {
    %c0_i32 = arith.constant 0 : i32
    %c0_i32_0 = arith.constant 0 : i32
    %c0_i32_1 = arith.constant 0 : i32
    return %arg0, %c0_i32, %c0_i32_0 : i32, i32, i32
  }
  func.func @transform_2(%arg0: i32, %arg1: i32) -> (i32, i32) {
    %c0_i32 = arith.constant 0 : i32
    %c0_i32_0 = arith.constant 0 : i32
    %c0_i32_1 = arith.constant 0 : i32
    return %c0_i32, %c0_i32_0 : i32, i32
  }
  func.func @transform_3(%arg0: i32, %arg1: i32) -> (i32, i32, i32) {
    %c0_i32 = arith.constant 0 : i32
    %c0_i32_0 = arith.constant 0 : i32
    %c0_i32_1 = arith.constant 0 : i32
    %c0_i32_2 = arith.constant 0 : i32
    return %c0_i32, %c0_i32_0, %c0_i32_1 : i32, i32, i32
  }
  func.func @transform_4(%arg0: i32, %arg1: i32) -> (i32, i32) {
    %c0_i32 = arith.constant 0 : i32
    %c0_i32_0 = arith.constant 0 : i32
    %c0_i32_1 = arith.constant 0 : i32
    return %c0_i32, %c0_i32_0 : i32, i32
  }
  func.func @transform_5(%arg0: i32, %arg1: i32) -> (i32, i32) {
    %c0_i32 = arith.constant 0 : i32
    %c0_i32_0 = arith.constant 0 : i32
    %c0_i32_1 = arith.constant 0 : i32
    return %c0_i32, %c0_i32_0 : i32, i32
  }
  func.func @transform_6(%arg0: i32, %arg1: i32) -> (i32, i32) {
    %c0_i32 = arith.constant 0 : i32
    %c0_i32_0 = arith.constant 0 : i32
    %c0_i32_1 = arith.constant 0 : i32
    return %c0_i32, %c0_i32_0 : i32, i32
  }
  func.func @transform_7(%arg0: i32, %arg1: i32) -> (i32, i32) {
    %c0_i32 = arith.constant 0 : i32
    %c0_i32_0 = arith.constant 0 : i32
    %c0_i32_1 = arith.constant 0 : i32
    return %c0_i32, %c0_i32_0 : i32, i32
  }
  func.func @transform_8(%arg0: i32, %arg1: i32) -> (i32, i32, i32) {
    %c0_i32 = arith.constant 0 : i32
    %c0_i32_0 = arith.constant 0 : i32
    %c0_i32_1 = arith.constant 0 : i32
    return %arg1, %c0_i32, %c0_i32_0 : i32, i32, i32
  }
  func.func @transform_9(%arg0: i32, %arg1: i32) -> (i32, i32, i32) {
    %c0_i32 = arith.constant 0 : i32
    %c0_i32_0 = arith.constant 0 : i32
    %c0_i32_1 = arith.constant 0 : i32
    return %arg1, %c0_i32, %c0_i32_0 : i32, i32, i32
  }
  func.func @transform_10(%arg0: i32, %arg1: i32) -> (i32, i32, i32) {
    %c0_i32 = arith.constant 0 : i32
    %c0_i32_0 = arith.constant 0 : i32
    %c0_i32_1 = arith.constant 0 : i32
    return %arg1, %c0_i32, %c0_i32_0 : i32, i32, i32
  }
  func.func @transform_11(%arg0: i32, %arg1: i32) -> (i32, i32, i32) {
    %c0_i32 = arith.constant 0 : i32
    %c0_i32_0 = arith.constant 0 : i32
    %c0_i32_1 = arith.constant 0 : i32
    return %arg1, %c0_i32, %c0_i32_0 : i32, i32, i32
  }
  func.func @transform_12(%arg0: i32, %arg1: i32) -> (i32, i32, i32) {
    %c0_i32 = arith.constant 0 : i32
    %c0_i32_0 = arith.constant 0 : i32
    %c0_i32_1 = arith.constant 0 : i32
    return %arg1, %c0_i32, %c0_i32_0 : i32, i32, i32
  }
  func.func @transform_13(%arg0: i32, %arg1: i32) -> (i32, i32, i32) {
    %c0_i32 = arith.constant 0 : i32
    %c0_i32_0 = arith.constant 0 : i32
    %c0_i32_1 = arith.constant 0 : i32
    return %arg1, %c0_i32, %c0_i32_0 : i32, i32, i32
  }
  func.func @transform_14(%arg0: i32, %arg1: i32) -> (i32, i32, i32, i32) {
    %c0_i32 = arith.constant 0 : i32
    %c0_i32_0 = arith.constant 0 : i32
    %c0_i32_1 = arith.constant 0 : i32
    %c0_i32_2 = arith.constant 0 : i32
    return %arg1, %c0_i32, %c0_i32_0, %c0_i32_1 : i32, i32, i32, i32
  }
  func.func @transform_15(%arg0: i32, %arg1: i32) -> (i32, i32, i32) {
    %c0_i32 = arith.constant 0 : i32
    %c0_i32_0 = arith.constant 0 : i32
    %c0_i32_1 = arith.constant 0 : i32
    return %arg1, %c0_i32, %c0_i32_0 : i32, i32, i32
  }
  func.func @transform_16(%arg0: i32, %arg1: i32) -> (i32, i32, i32, i32) {
    %c0_i32 = arith.constant 0 : i32
    %c0_i32_0 = arith.constant 0 : i32
    %c0_i32_1 = arith.constant 0 : i32
    %c0_i32_2 = arith.constant 0 : i32
    return %arg1, %c0_i32, %c0_i32_0, %c0_i32_1 : i32, i32, i32, i32
  }
  func.func @transform_17(%arg0: i32, %arg1: i32) -> (i32, i32, i32) {
    %c0_i32 = arith.constant 0 : i32
    %c0_i32_0 = arith.constant 0 : i32
    %c0_i32_1 = arith.constant 0 : i32
    return %arg1, %c0_i32, %c0_i32_0 : i32, i32, i32
  }
  func.func @transform_18(%arg0: i32, %arg1: i32) -> (i32, i32, i32) {
    %c0_i32 = arith.constant 0 : i32
    %c0_i32_0 = arith.constant 0 : i32
    %c0_i32_1 = arith.constant 0 : i32
    return %arg1, %c0_i32, %c0_i32_0 : i32, i32, i32
  }
  func.func @transform_19(%arg0: i32, %arg1: i32) -> (i32, i32, i32) {
    %c0_i32 = arith.constant 0 : i32
    %c0_i32_0 = arith.constant 0 : i32
    %c0_i32_1 = arith.constant 0 : i32
    return %arg0, %c0_i32, %c0_i32_0 : i32, i32, i32
  }
}

</mosaic_0001>

<llo_original>
// kernel: gmlp_split_forward.1
$region0: #{gmlp_split_forward.1}
  #allocation0 [shape = 'u32[]', space=smem, size = 0x4, offset = 0x4, fixed_abs, tag = 'smem constant byte address 0x4 - core index']
  #allocation1 [shape = 'u32[144,128]{1,0:T(1,128)}', space=vmem, size = 0x12000, scoped, tag = 'internal scratch']
  #allocation2 [shape = 'f32[8,64]{1,0:T(8,128)}', space=vmem, size = 0x1000, scoped, tag = 'scratch operand']
  #allocation3 [shape = 'f32[7,8,32]{2,1,0:T(8,128)}', space=vmem, size = 0x7000, scoped, tag = 'scratch operand']
  %s0 = inlined_call_operand.vmem [shape: f32[2,8,64], index: 0, kind: input, shape index: {}]
  %s1 = inlined_call_operand.vmem [shape: f32[2,8,7], index: 1, kind: input, shape index: {}]
  %s2 = inlined_call_operand.vmem [shape: f32[64,64], index: 2, kind: input, shape index: {}]
  %s3 = inlined_call_operand.vmem [shape: f32[4,1,32], index: 3, kind: input, shape index: {}]
  %s4 = inlined_call_operand.vmem [shape: f32[1,64], index: 4, kind: input, shape index: {}]
  %s5 = inlined_call_operand.vmem [shape: f32[1,64], index: 5, kind: input, shape index: {}]
  %s6 = inlined_call_operand.vmem [shape: f32[64,64], index: 6, kind: input, shape index: {}]
  %s7 = inlined_call_operand.vmem [shape: f32[1,64], index: 7, kind: input, shape index: {}]
  %s8 = inlined_call_operand.vmem [shape: f32[2,1,64], index: 8, kind: input, shape index: {}]
  %s9 = inlined_call_operand.vmem [shape: f32[2,1,64], index: 9, kind: input, shape index: {}]
  %s10 = inlined_call_operand.vmem [shape: f32[2,64,64], index: 10, kind: input, shape index: {}]
  %s11 = inlined_call_operand.vmem [shape: f32[2,1,64], index: 11, kind: input, shape index: {}]
  %s12 = inlined_call_operand.vmem [shape: f32[2,1,32], index: 12, kind: input, shape index: {}]
  %s13 = inlined_call_operand.vmem [shape: f32[2,1,32], index: 13, kind: input, shape index: {}]
  %s14 = inlined_call_operand.vmem [shape: f32[2,4,8,8], index: 14, kind: input, shape index: {}]
  %s15 = inlined_call_operand.vmem [shape: f32[2,8,32], index: 15, kind: input, shape index: {}]
  %s16 = inlined_call_operand.vmem [shape: f32[2,7,8,32], index: 16, kind: input, shape index: {}]
  %s17 = inlined_call_operand.vmem [shape: f32[2,64,64], index: 17, kind: input, shape index: {}]
  %s18 = inlined_call_operand.vmem [shape: f32[2,1,64], index: 18, kind: input, shape index: {}]
  %s19 = inlined_call_operand.vmem [shape: f32[2,8,128], index: 19, kind: output, shape index: {}]
  %s20 = sld [smem:[#allocation0]]
  $region117: #{gmlp_split_forward.1} parent=0
    _
  %s22 = ssub.s32 1, %s20
  %s23 = scalar_select 0, %s22, %s20
  loop: start=0, step=1, limit=6
  $region2: #{gmlp_split_forward.1} parent=0 // loop_pre_header
    _
  $region3: #{gmlp_split_forward.1} parent=0 // loop_header
    %s25 = sphi 0, %s29
    %p26 = scmp.ge.s32.totalorder %s25, 6
    %s32 = sphi 0, %s44
    %s33 = sphi 0, %s40
    %s34 = sphi 0, %s32
    %s35 = sphi 0, %s33
    %s36 = sphi 0, %s34
    %s37 = sphi 0, %s35
    %s47 = sphi 0, %s49
    %s50 = sphi 0, %s47
    %s51 = sphi 0, %s50
    %s67 = sphi 0, %s51
    %s73 = sphi 0, %s75
    %s76 = sphi 0, %s73
    %s77 = sphi 0, %s76
    %s93 = sphi 0, %s77
    %s97 = sphi 0, %s97
    %s99 = sphi 0, %s97
    %s100 = sphi 0, %s99
    %s114 = sphi 0, %s100
    %s118 = sphi 0, %s118
    %s120 = sphi 0, %s118
    %s121 = sphi 0, %s120
    %s135 = sphi 0, %s121
    %s139 = sphi 0, %s139
    %s141 = sphi 0, %s139
    %s142 = sphi 0, %s141
    %s156 = sphi 0, %s142
    %s160 = sphi 0, %s160
    %s162 = sphi 0, %s160
    %s163 = sphi 0, %s162
    %s177 = sphi 0, %s163
    %s181 = sphi 0, %s181
    %s183 = sphi 0, %s181
    %s184 = sphi 0, %s183
    %s198 = sphi 0, %s184
    %s202 = sphi 0, %s202
    %s204 = sphi 0, %s202
    %s205 = sphi 0, %s204
    %s219 = sphi 0, %s205
    %s225 = sphi 0, %s227
    %s228 = sphi 0, %s225
    %s229 = sphi 0, %s228
    %s245 = sphi 0, %s229
    %s251 = sphi 0, %s253
    %s254 = sphi 0, %s251
    %s255 = sphi 0, %s254
    %s271 = sphi 0, %s255
    %s277 = sphi 0, %s279
    %s280 = sphi 0, %s277
    %s281 = sphi 0, %s280
    %s297 = sphi 0, %s281
    %s303 = sphi 0, %s305
    %s306 = sphi 0, %s303
    %s307 = sphi 0, %s306
    %s323 = sphi 0, %s307
    %s329 = sphi 0, %s331
    %s332 = sphi 0, %s329
    %s333 = sphi 0, %s332
    %s349 = sphi 0, %s333
    %s355 = sphi 0, %s357
    %s358 = sphi 0, %s355
    %s359 = sphi 0, %s358
    %s375 = sphi 0, %s359
    %s381 = sphi 0, %s383
    %s384 = sphi 0, %s381
    %s385 = sphi 0, %s384
    %s401 = sphi 0, %s385
    %s407 = sphi 0, %s409
    %s410 = sphi 0, %s407
    %s411 = sphi 0, %s410
    %s427 = sphi 0, %s411
    %s433 = sphi 0, %s435
    %s436 = sphi 0, %s433
    %s437 = sphi 0, %s436
    %s453 = sphi 0, %s437
    %s459 = sphi 0, %s461
    %s462 = sphi 0, %s459
    %s463 = sphi 0, %s462
    %s479 = sphi 0, %s463
    %s485 = sphi 0, %s487
    %s488 = sphi 0, %s485
    %s489 = sphi 0, %s488
    %s505 = sphi 0, %s489
    %s511 = sphi 0, %s513
    %s514 = sphi 0, %s511
    %s515 = sphi 0, %s514
    %s531 = sphi 0, %s515
  $region4: #{gmlp_split_forward.1} parent=0 // loop_header_branch
    %28 = sbr.rel (%p26) target = $region8
  $region5: #{gmlp_split_forward.1} parent=0 // loop_body
    %s30 = ssub.s32 %s25, 1
    %s31 = ssub.s32 %s25, 2
    %s38 = sadd.s32 1, %s33
    %p39 = scmp.ge.s32.totalorder %s38, 2
    %s40 = scalar_select %p39, 0, %s38
    %s41 = sadd.s32 1, %s32
    %s42 = scalar_select %p39, %s41, %s32
    %p43 = scmp.ge.s32.totalorder %s42, 2
    %s44 = scalar_select %p43, 0, %s42
    %s45 = ssub.s32 %s32, %s44
    %p46 = scmp.eq.s32.totalorder %s45, 0
    %s48 = sadd.s32 %s47, 1
    %s49 = scalar_select %p46, %s47, %s48
    %p52 = pneg %p46
    %p53 = scmp.eq.s32.totalorder %s25, 3
    %p54 = por %p52, %p53
    %p55 = scmp.ne.s32.totalorder %s47, %s50
    %p56 = scmp.eq.s32.totalorder %s25, 0
    %p57 = por %p55, %p56
    %p58 = scmp.ne.s32.totalorder %s47, %s50
    %p59 = scmp.eq.s32.totalorder %s30, 3
    %p60 = por %p58, %p59
    %p61 = scmp.ne.s32.totalorder %s50, %s51
    %p62 = scmp.eq.s32.totalorder %s30, 0
    %p63 = por %p61, %p62
    %p64 = scmp.ne.s32.totalorder %s50, %s51
    %p65 = scmp.eq.s32.totalorder %s31, 3
    %p66 = por %p64, %p65
    %p68 = scmp.ne.s32.totalorder %s51, %s67
    %p69 = scmp.eq.s32.totalorder %s31, 0
    %p70 = por %p68, %p69
    %s71 = ssub.s32 %s32, %s44
    %p72 = scmp.eq.s32.totalorder %s71, 0
    %s74 = sadd.s32 %s73, 1
    %s75 = scalar_select %p72, %s73, %s74
    %p78 = pneg %p72
    %p79 = scmp.eq.s32.totalorder %s25, 3
    %p80 = por %p78, %p79
    %p81 = scmp.ne.s32.totalorder %s73, %s76
    %p82 = scmp.eq.s32.totalorder %s25, 0
    %p83 = por %p81, %p82
    %p84 = scmp.ne.s32.totalorder %s73, %s76
    %p85 = scmp.eq.s32.totalorder %s30, 3
    %p86 = por %p84, %p85
    %p87 = scmp.ne.s32.totalorder %s76, %s77
    %p88 = scmp.eq.s32.totalorder %s30, 0
    %p89 = por %p87, %p88
    %p90 = scmp.ne.s32.totalorder %s76, %s77
    %p91 = scmp.eq.s32.totalorder %s31, 3
    %p92 = por %p90, %p91
    %p94 = scmp.ne.s32.totalorder %s77, %s93
    %p95 = scmp.eq.s32.totalorder %s31, 0
    %p96 = por %p94, %p95
    %s98 = sadd.s32 %s97, 1
    %p101 = scmp.eq.s32.totalorder %s25, 3
    %p102 = scmp.ne.s32.totalorder %s97, %s99
    %p103 = scmp.eq.s32.totalorder %s25, 0
    %p104 = por %p102, %p103
    %p105 = scmp.ne.s32.totalorder %s97, %s99
    %p106 = scmp.eq.s32.totalorder %s30, 3
    %p107 = por %p105, %p106
    %p108 = scmp.ne.s32.totalorder %s99, %s100
    %p109 = scmp.eq.s32.totalorder %s30, 0
    %p110 = por %p108, %p109
    %p111 = scmp.ne.s32.totalorder %s99, %s100
    %p112 = scmp.eq.s32.totalorder %s31, 3
    %p113 = por %p111, %p112
    %p115 = scmp.ne.s32.totalorder %s100, %s114
    %p116 = scmp.eq.s32.totalorder %s31, 0
    %p117 = por %p115, %p116
    %s119 = sadd.s32 %s118, 1
    %p122 = scmp.eq.s32.totalorder %s25, 3
    %p123 = scmp.ne.s32.totalorder %s118, %s120
    %p124 = scmp.eq.s32.totalorder %s25, 0
    %p125 = por %p123, %p124
    %p126 = scmp.ne.s32.totalorder %s118, %s120
    %p127 = scmp.eq.s32.totalorder %s30, 3
    %p128 = por %p126, %p127
    %p129 = scmp.ne.s32.totalorder %s120, %s121
    %p130 = scmp.eq.s32.totalorder %s30, 0
    %p131 = por %p129, %p130
    %p132 = scmp.ne.s32.totalorder %s120, %s121
    %p133 = scmp.eq.s32.totalorder %s31, 3
    %p134 = por %p132, %p133
    %p136 = scmp.ne.s32.totalorder %s121, %s135
    %p137 = scmp.eq.s32.totalorder %s31, 0
    %p138 = por %p136, %p137
    %s140 = sadd.s32 %s139, 1
    %p143 = scmp.eq.s32.totalorder %s25, 3
    %p144 = scmp.ne.s32.totalorder %s139, %s141
    %p145 = scmp.eq.s32.totalorder %s25, 0
    %p146 = por %p144, %p145
    %p147 = scmp.ne.s32.totalorder %s139, %s141
    %p148 = scmp.eq.s32.totalorder %s30, 3
    %p149 = por %p147, %p148
    %p150 = scmp.ne.s32.totalorder %s141, %s142
    %p151 = scmp.eq.s32.totalorder %s30, 0
    %p152 = por %p150, %p151
    %p153 = scmp.ne.s32.totalorder %s141, %s142
    %p154 = scmp.eq.s32.totalorder %s31, 3
    %p155 = por %p153, %p154
    %p157 = scmp.ne.s32.totalorder %s142, %s156
    %p158 = scmp.eq.s32.totalorder %s31, 0
    %p159 = por %p157, %p158
    %s161 = sadd.s32 %s160, 1
    %p164 = scmp.eq.s32.totalorder %s25, 3
    %p165 = scmp.ne.s32.totalorder %s160, %s162
    %p166 = scmp.eq.s32.totalorder %s25, 0
    %p167 = por %p165, %p166
    %p168 = scmp.ne.s32.totalorder %s160, %s162
    %p169 = scmp.eq.s32.totalorder %s30, 3
    %p170 = por %p168, %p169
    %p171 = scmp.ne.s32.totalorder %s162, %s163
    %p172 = scmp.eq.s32.totalorder %s30, 0
    %p173 = por %p171, %p172
    %p174 = scmp.ne.s32.totalorder %s162, %s163
    %p175 = scmp.eq.s32.totalorder %s31, 3
    %p176 = por %p174, %p175
    %p178 = scmp.ne.s32.totalorder %s163, %s177
    %p179 = scmp.eq.s32.totalorder %s31, 0
    %p180 = por %p178, %p179
    %s182 = sadd.s32 %s181, 1
    %p185 = scmp.eq.s32.totalorder %s25, 3
    %p186 = scmp.ne.s32.totalorder %s181, %s183
    %p187 = scmp.eq.s32.totalorder %s25, 0
    %p188 = por %p186, %p187
    %p189 = scmp.ne.s32.totalorder %s181, %s183
    %p190 = scmp.eq.s32.totalorder %s30, 3
    %p191 = por %p189, %p190
    %p192 = scmp.ne.s32.totalorder %s183, %s184
    %p193 = scmp.eq.s32.totalorder %s30, 0
    %p194 = por %p192, %p193
    %p195 = scmp.ne.s32.totalorder %s183, %s184
    %p196 = scmp.eq.s32.totalorder %s31, 3
    %p197 = por %p195, %p196
    %p199 = scmp.ne.s32.totalorder %s184, %s198
    %p200 = scmp.eq.s32.totalorder %s31, 0
    %p201 = por %p199, %p200
    %s203 = sadd.s32 %s202, 1
    %p206 = scmp.eq.s32.totalorder %s25, 3
    %p207 = scmp.ne.s32.totalorder %s202, %s204
    %p208 = scmp.eq.s32.totalorder %s25, 0
    %p209 = por %p207, %p208
    %p210 = scmp.ne.s32.totalorder %s202, %s204
    %p211 = scmp.eq.s32.totalorder %s30, 3
    %p212 = por %p210, %p211
    %p213 = scmp.ne.s32.totalorder %s204, %s205
    %p214 = scmp.eq.s32.totalorder %s30, 0
    %p215 = por %p213, %p214
    %p216 = scmp.ne.s32.totalorder %s204, %s205
    %p217 = scmp.eq.s32.totalorder %s31, 3
    %p218 = por %p216, %p217
    %p220 = scmp.ne.s32.totalorder %s205, %s219
    %p221 = scmp.eq.s32.totalorder %s31, 0
    %p222 = por %p220, %p221
    %s223 = ssub.s32 %s33, %s40
    %p224 = scmp.eq.s32.totalorder %s223, 0
    %s226 = sadd.s32 %s225, 1
    %s227 = scalar_select %p224, %s225, %s226
    %p230 = pneg %p224
    %p231 = scmp.eq.s32.totalorder %s25, 3
    %p232 = por %p230, %p231
    %p233 = scmp.ne.s32.totalorder %s225, %s228
    %p234 = scmp.eq.s32.totalorder %s25, 0
    %p235 = por %p233, %p234
    %p236 = scmp.ne.s32.totalorder %s225, %s228
    %p237 = scmp.eq.s32.totalorder %s30, 3
    %p238 = por %p236, %p237
    %p239 = scmp.ne.s32.totalorder %s228, %s229
    %p240 = scmp.eq.s32.totalorder %s30, 0
    %p241 = por %p239, %p240
    %p242 = scmp.ne.s32.totalorder %s228, %s229
    %p243 = scmp.eq.s32.totalorder %s31, 3
    %p244 = por %p242, %p243
    %p246 = scmp.ne.s32.totalorder %s229, %s245
    %p247 = scmp.eq.s32.totalorder %s31, 0
    %p248 = por %p246, %p247
    %s249 = ssub.s32 %s33, %s40
    %p250 = scmp.eq.s32.totalorder %s249, 0
    %s252 = sadd.s32 %s251, 1
    %s253 = scalar_select %p250, %s251, %s252
    %p256 = pneg %p250
    %p257 = scmp.eq.s32.totalorder %s25, 3
    %p258 = por %p256, %p257
    %p259 = scmp.ne.s32.totalorder %s251, %s254
    %p260 = scmp.eq.s32.totalorder %s25, 0
    %p261 = por %p259, %p260
    %p262 = scmp.ne.s32.totalorder %s251, %s254
    %p263 = scmp.eq.s32.totalorder %s30, 3
    %p264 = por %p262, %p263
    %p265 = scmp.ne.s32.totalorder %s254, %s255
    %p266 = scmp.eq.s32.totalorder %s30, 0
    %p267 = por %p265, %p266
    %p268 = scmp.ne.s32.totalorder %s254, %s255
    %p269 = scmp.eq.s32.totalorder %s31, 3
    %p270 = por %p268, %p269
    %p272 = scmp.ne.s32.totalorder %s255, %s271
    %p273 = scmp.eq.s32.totalorder %s31, 0
    %p274 = por %p272, %p273
    %s275 = ssub.s32 %s33, %s40
    %p276 = scmp.eq.s32.totalorder %s275, 0
    %s278 = sadd.s32 %s277, 1
    %s279 = scalar_select %p276, %s277, %s278
    %p282 = pneg %p276
    %p283 = scmp.eq.s32.totalorder %s25, 3
    %p284 = por %p282, %p283
    %p285 = scmp.ne.s32.totalorder %s277, %s280
    %p286 = scmp.eq.s32.totalorder %s25, 0
    %p287 = por %p285, %p286
    %p288 = scmp.ne.s32.totalorder %s277, %s280
    %p289 = scmp.eq.s32.totalorder %s30, 3
    %p290 = por %p288, %p289
    %p291 = scmp.ne.s32.totalorder %s280, %s281
    %p292 = scmp.eq.s32.totalorder %s30, 0
    %p293 = por %p291, %p292
    %p294 = scmp.ne.s32.totalorder %s280, %s281
    %p295 = scmp.eq.s32.totalorder %s31, 3
    %p296 = por %p294, %p295
    %p298 = scmp.ne.s32.totalorder %s281, %s297
    %p299 = scmp.eq.s32.totalorder %s31, 0
    %p300 = por %p298, %p299
    %s301 = ssub.s32 %s33, %s40
    %p302 = scmp.eq.s32.totalorder %s301, 0
    %s304 = sadd.s32 %s303, 1
    %s305 = scalar_select %p302, %s303, %s304
    %p308 = pneg %p302
    %p309 = scmp.eq.s32.totalorder %s25, 3
    %p310 = por %p308, %p309
    %p311 = scmp.ne.s32.totalorder %s303, %s306
    %p312 = scmp.eq.s32.totalorder %s25, 0
    %p313 = por %p311, %p312
    %p314 = scmp.ne.s32.totalorder %s303, %s306
    %p315 = scmp.eq.s32.totalorder %s30, 3
    %p316 = por %p314, %p315
    %p317 = scmp.ne.s32.totalorder %s306, %s307
    %p318 = scmp.eq.s32.totalorder %s30, 0
    %p319 = por %p317, %p318
    %p320 = scmp.ne.s32.totalorder %s306, %s307
    %p321 = scmp.eq.s32.totalorder %s31, 3
    %p322 = por %p320, %p321
    %p324 = scmp.ne.s32.totalorder %s307, %s323
    %p325 = scmp.eq.s32.totalorder %s31, 0
    %p326 = por %p324, %p325
    %s327 = ssub.s32 %s33, %s40
    %p328 = scmp.eq.s32.totalorder %s327, 0
    %s330 = sadd.s32 %s329, 1
    %s331 = scalar_select %p328, %s329, %s330
    %p334 = pneg %p328
    %p335 = scmp.eq.s32.totalorder %s25, 3
    %p336 = por %p334, %p335
    %p337 = scmp.ne.s32.totalorder %s329, %s332
    %p338 = scmp.eq.s32.totalorder %s25, 0
    %p339 = por %p337, %p338
    %p340 = scmp.ne.s32.totalorder %s329, %s332
    %p341 = scmp.eq.s32.totalorder %s30, 3
    %p342 = por %p340, %p341
    %p343 = scmp.ne.s32.totalorder %s332, %s333
    %p344 = scmp.eq.s32.totalorder %s30, 0
    %p345 = por %p343, %p344
    %p346 = scmp.ne.s32.totalorder %s332, %s333
    %p347 = scmp.eq.s32.totalorder %s31, 3
    %p348 = por %p346, %p347
    %p350 = scmp.ne.s32.totalorder %s333, %s349
    %p351 = scmp.eq.s32.totalorder %s31, 0
    %p352 = por %p350, %p351
    %s353 = ssub.s32 %s33, %s40
    %p354 = scmp.eq.s32.totalorder %s353, 0
    %s356 = sadd.s32 %s355, 1
    %s357 = scalar_select %p354, %s355, %s356
    %p360 = pneg %p354
    %p361 = scmp.eq.s32.totalorder %s25, 3
    %p362 = por %p360, %p361
    %p363 = scmp.ne.s32.totalorder %s355, %s358
    %p364 = scmp.eq.s32.totalorder %s25, 0
    %p365 = por %p363, %p364
    %p366 = scmp.ne.s32.totalorder %s355, %s358
    %p367 = scmp.eq.s32.totalorder %s30, 3
    %p368 = por %p366, %p367
    %p369 = scmp.ne.s32.totalorder %s358, %s359
    %p370 = scmp.eq.s32.totalorder %s30, 0
    %p371 = por %p369, %p370
    %p372 = scmp.ne.s32.totalorder %s358, %s359
    %p373 = scmp.eq.s32.totalorder %s31, 3
    %p374 = por %p372, %p373
    %p376 = scmp.ne.s32.totalorder %s359, %s375
    %p377 = scmp.eq.s32.totalorder %s31, 0
    %p378 = por %p376, %p377
    %s379 = ssub.s32 %s33, %s40
    %p380 = scmp.eq.s32.totalorder %s379, 0
    %s382 = sadd.s32 %s381, 1
    %s383 = scalar_select %p380, %s381, %s382
    %p386 = pneg %p380
    %p387 = scmp.eq.s32.totalorder %s25, 3
    %p388 = por %p386, %p387
    %p389 = scmp.ne.s32.totalorder %s381, %s384
    %p390 = scmp.eq.s32.totalorder %s25, 0
    %p391 = por %p389, %p390
    %p392 = scmp.ne.s32.totalorder %s381, %s384
    %p393 = scmp.eq.s32.totalorder %s30, 3
    %p394 = por %p392, %p393
    %p395 = scmp.ne.s32.totalorder %s384, %s385
    %p396 = scmp.eq.s32.totalorder %s30, 0
    %p397 = por %p395, %p396
    %p398 = scmp.ne.s32.totalorder %s384, %s385
    %p399 = scmp.eq.s32.totalorder %s31, 3
    %p400 = por %p398, %p399
    %p402 = scmp.ne.s32.totalorder %s385, %s401
    %p403 = scmp.eq.s32.totalorder %s31, 0
    %p404 = por %p402, %p403
    %s405 = ssub.s32 %s33, %s40
    %p406 = scmp.eq.s32.totalorder %s405, 0
    %s408 = sadd.s32 %s407, 1
    %s409 = scalar_select %p406, %s407, %s408
    %p412 = pneg %p406
    %p413 = scmp.eq.s32.totalorder %s25, 3
    %p414 = por %p412, %p413
    %p415 = scmp.ne.s32.totalorder %s407, %s410
    %p416 = scmp.eq.s32.totalorder %s25, 0
    %p417 = por %p415, %p416
    %p418 = scmp.ne.s32.totalorder %s407, %s410
    %p419 = scmp.eq.s32.totalorder %s30, 3
    %p420 = por %p418, %p419
    %p421 = scmp.ne.s32.totalorder %s410, %s411
    %p422 = scmp.eq.s32.totalorder %s30, 0
    %p423 = por %p421, %p422
    %p424 = scmp.ne.s32.totalorder %s410, %s411
    %p425 = scmp.eq.s32.totalorder %s31, 3
    %p426 = por %p424, %p425
    %p428 = scmp.ne.s32.totalorder %s411, %s427
    %p429 = scmp.eq.s32.totalorder %s31, 0
    %p430 = por %p428, %p429
    %s431 = ssub.s32 %s33, %s40
    %p432 = scmp.eq.s32.totalorder %s431, 0
    %s434 = sadd.s32 %s433, 1
    %s435 = scalar_select %p432, %s433, %s434
    %p438 = pneg %p432
    %p439 = scmp.eq.s32.totalorder %s25, 3
    %p440 = por %p438, %p439
    %p441 = scmp.ne.s32.totalorder %s433, %s436
    %p442 = scmp.eq.s32.totalorder %s25, 0
    %p443 = por %p441, %p442
    %p444 = scmp.ne.s32.totalorder %s433, %s436
    %p445 = scmp.eq.s32.totalorder %s30, 3
    %p446 = por %p444, %p445
    %p447 = scmp.ne.s32.totalorder %s436, %s437
    %p448 = scmp.eq.s32.totalorder %s30, 0
    %p449 = por %p447, %p448
    %p450 = scmp.ne.s32.totalorder %s436, %s437
    %p451 = scmp.eq.s32.totalorder %s31, 3
    %p452 = por %p450, %p451
    %p454 = scmp.ne.s32.totalorder %s437, %s453
    %p455 = scmp.eq.s32.totalorder %s31, 0
    %p456 = por %p454, %p455
    %s457 = ssub.s32 %s33, %s40
    %p458 = scmp.eq.s32.totalorder %s457, 0
    %s460 = sadd.s32 %s459, 1
    %s461 = scalar_select %p458, %s459, %s460
    %p464 = pneg %p458
    %p465 = scmp.eq.s32.totalorder %s25, 3
    %p466 = por %p464, %p465
    %p467 = scmp.ne.s32.totalorder %s459, %s462
    %p468 = scmp.eq.s32.totalorder %s25, 0
    %p469 = por %p467, %p468
    %p470 = scmp.ne.s32.totalorder %s459, %s462
    %p471 = scmp.eq.s32.totalorder %s30, 3
    %p472 = por %p470, %p471
    %p473 = scmp.ne.s32.totalorder %s462, %s463
    %p474 = scmp.eq.s32.totalorder %s30, 0
    %p475 = por %p473, %p474
    %p476 = scmp.ne.s32.totalorder %s462, %s463
    %p477 = scmp.eq.s32.totalorder %s31, 3
    %p478 = por %p476, %p477
    %p480 = scmp.ne.s32.totalorder %s463, %s479
    %p481 = scmp.eq.s32.totalorder %s31, 0
    %p482 = por %p480, %p481
    %s483 = ssub.s32 %s33, %s40
    %p484 = scmp.eq.s32.totalorder %s483, 0
    %s486 = sadd.s32 %s485, 1
    %s487 = scalar_select %p484, %s485, %s486
    %p490 = pneg %p484
    %p491 = scmp.eq.s32.totalorder %s25, 3
    %p492 = por %p490, %p491
    %p493 = scmp.ne.s32.totalorder %s485, %s488
    %p494 = scmp.eq.s32.totalorder %s25, 0
    %p495 = por %p493, %p494
    %p496 = scmp.ne.s32.totalorder %s485, %s488
    %p497 = scmp.eq.s32.totalorder %s30, 3
    %p498 = por %p496, %p497
    %p499 = scmp.ne.s32.totalorder %s488, %s489
    %p500 = scmp.eq.s32.totalorder %s30, 0
    %p501 = por %p499, %p500
    %p502 = scmp.ne.s32.totalorder %s488, %s489
    %p503 = scmp.eq.s32.totalorder %s31, 3
    %p504 = por %p502, %p503
    %p506 = scmp.ne.s32.totalorder %s489, %s505
    %p507 = scmp.eq.s32.totalorder %s31, 0
    %p508 = por %p506, %p507
    %s509 = ssub.s32 %s32, %s44
    %p510 = scmp.eq.s32.totalorder %s509, 0
    %s512 = sadd.s32 %s511, 1
    %s513 = scalar_select %p510, %s511, %s512
    %p516 = pneg %p510
    %p517 = scmp.eq.s32.totalorder %s25, 3
    %p518 = por %p516, %p517
    %p519 = scmp.ne.s32.totalorder %s511, %s514
    %p520 = scmp.eq.s32.totalorder %s25, 0
    %p521 = por %p519, %p520
    %p522 = scmp.ne.s32.totalorder %s511, %s514
    %p523 = scmp.eq.s32.totalorder %s30, 3
    %p524 = por %p522, %p523
    %p525 = scmp.ne.s32.totalorder %s514, %s515
    %p526 = scmp.eq.s32.totalorder %s30, 0
    %p527 = por %p525, %p526
    %p528 = scmp.ne.s32.totalorder %s514, %s515
    %p529 = scmp.eq.s32.totalorder %s31, 3
    %p530 = por %p528, %p529
    %p532 = scmp.ne.s32.totalorder %s515, %s531
    %p533 = scmp.eq.s32.totalorder %s31, 0
    %p534 = por %p532, %p533
    %p535 = scmp.le.s32.totalorder 1, %s25
    %p536 = scmp.lt.s32.totalorder %s25, 5
    %p537 = pnand %p535, %p536
    %p538 = pneg %p537
    // Predicated region
    $region9: #{gmlp_split_forward.1} parent=5 // pred_check
      _
    $region10: #{gmlp_split_forward.1} parent=5 // pred_check_branch
      %540 = sbr.rel (%p537) target = $region12
    $region11: #{gmlp_split_forward.1} parent=5 // pred_region
      %s541 = ssub.s32 %s25, 1
      // Predicated region
      $region13: #{gmlp_split_forward.1} parent=11 // pred_check
        %p542 = pneg %p110
      $region14: #{gmlp_split_forward.1} parent=11 // pred_check_branch
        %544 = sbr.rel (%p542) target = $region16
      $region15: #{gmlp_split_forward.1} parent=11 // pred_region
        _
      $region16: #{gmlp_split_forward.1} parent=11 // pred_fallthru
        _
      // Predicated region
      $region17: #{gmlp_split_forward.1} parent=11 // pred_check
        %p545 = pneg %p131
      $region18: #{gmlp_split_forward.1} parent=11 // pred_check_branch
        %547 = sbr.rel (%p545) target = $region20
      $region19: #{gmlp_split_forward.1} parent=11 // pred_region
        _
      $region20: #{gmlp_split_forward.1} parent=11 // pred_fallthru
        _
      // Predicated region
      $region21: #{gmlp_split_forward.1} parent=11 // pred_check
        %p548 = pneg %p152
      $region22: #{gmlp_split_forward.1} parent=11 // pred_check_branch
        %550 = sbr.rel (%p548) target = $region24
      $region23: #{gmlp_split_forward.1} parent=11 // pred_region
        _
      $region24: #{gmlp_split_forward.1} parent=11 // pred_fallthru
        _
      // Predicated region
      $region25: #{gmlp_split_forward.1} parent=11 // pred_check
        %p551 = pneg %p173
      $region26: #{gmlp_split_forward.1} parent=11 // pred_check_branch
        %553 = sbr.rel (%p551) target = $region28
      $region27: #{gmlp_split_forward.1} parent=11 // pred_region
        _
      $region28: #{gmlp_split_forward.1} parent=11 // pred_fallthru
        _
      // Predicated region
      $region29: #{gmlp_split_forward.1} parent=11 // pred_check
        %p554 = pneg %p194
      $region30: #{gmlp_split_forward.1} parent=11 // pred_check_branch
        %556 = sbr.rel (%p554) target = $region32
      $region31: #{gmlp_split_forward.1} parent=11 // pred_region
        _
      $region32: #{gmlp_split_forward.1} parent=11 // pred_fallthru
        _
      // Predicated region
      $region33: #{gmlp_split_forward.1} parent=11 // pred_check
        %p557 = pneg %p215
      $region34: #{gmlp_split_forward.1} parent=11 // pred_check_branch
        %559 = sbr.rel (%p557) target = $region36
      $region35: #{gmlp_split_forward.1} parent=11 // pred_region
        _
      $region36: #{gmlp_split_forward.1} parent=11 // pred_fallthru
        _
    $region12: #{gmlp_split_forward.1} parent=5 // pred_fallthru
      _
    %p560 = scmp.lt.s32.totalorder %s25, 4
    // Predicated region
    $region37: #{gmlp_split_forward.1} parent=5 // pred_check
      %p561 = pneg %p560
    $region38: #{gmlp_split_forward.1} parent=5 // pred_check_branch
      %563 = sbr.rel (%p561) target = $region40
    $region39: #{gmlp_split_forward.1} parent=5 // pred_region
      // Predicated region
      $region41: #{gmlp_split_forward.1} parent=39 // pred_check
        %p564 = pneg %p57
      $region42: #{gmlp_split_forward.1} parent=39 // pred_check_branch
        %566 = sbr.rel (%p564) target = $region44
      $region43: #{gmlp_split_forward.1} parent=39 // pred_region
        %p567 = scmp.lt.s32.totalorder %s32, 1
        %s568 = scalar_select %p567, %s32, 1
        %s569 = smul.addr %s568, 8
        %s570 = scalar_lea.vmem %s0, %s569
      $region44: #{gmlp_split_forward.1} parent=39 // pred_fallthru
        _
      // Predicated region
      $region45: #{gmlp_split_forward.1} parent=39 // pred_check
        %p571 = pneg %p83
      $region46: #{gmlp_split_forward.1} parent=39 // pred_check_branch
        %573 = sbr.rel (%p571) target = $region48
      $region47: #{gmlp_split_forward.1} parent=39 // pred_region
        %p574 = scmp.lt.s32.totalorder %s32, 1
        %s575 = scalar_select %p574, %s32, 1
        %s576 = smul.addr %s575, 8
        %s577 = scalar_lea.vmem %s1, %s576
      $region48: #{gmlp_split_forward.1} parent=39 // pred_fallthru
        _
      // Predicated region
      $region49: #{gmlp_split_forward.1} parent=39 // pred_check
        %p578 = pneg %p235
      $region50: #{gmlp_split_forward.1} parent=39 // pred_check_branch
        %580 = sbr.rel (%p578) target = $region52
      $region51: #{gmlp_split_forward.1} parent=39 // pred_region
        %p581 = scmp.lt.s32.totalorder %s33, 1
        %s582 = scalar_select %p581, %s33, 1
        %s583 = scalar_lea.vmem %s8, %s582
      $region52: #{gmlp_split_forward.1} parent=39 // pred_fallthru
        _
      // Predicated region
      $region53: #{gmlp_split_forward.1} parent=39 // pred_check
        %p584 = pneg %p261
      $region54: #{gmlp_split_forward.1} parent=39 // pred_check_branch
        %586 = sbr.rel (%p584) target = $region56
      $region55: #{gmlp_split_forward.1} parent=39 // pred_region
        %p587 = scmp.lt.s32.totalorder %s33, 1
        %s588 = scalar_select %p587, %s33, 1
        %s589 = scalar_lea.vmem %s9, %s588
      $region56: #{gmlp_split_forward.1} parent=39 // pred_fallthru
        _
      // Predicated region
      $region57: #{gmlp_split_forward.1} parent=39 // pred_check
        %p590 = pneg %p287
      $region58: #{gmlp_split_forward.1} parent=39 // pred_check_branch
        %592 = sbr.rel (%p590) target = $region60
      $region59: #{gmlp_split_forward.1} parent=39 // pred_region
        %p593 = scmp.lt.s32.totalorder %s33, 1
        %s594 = scalar_select %p593, %s33, 1
        %s595 = smul.addr %s594, 8
        %s596 = smul.addr %s595, 8
        %s597 = scalar_lea.vmem %s10, %s596
      $region60: #{gmlp_split_forward.1} parent=39 // pred_fallthru
        _
      // Predicated region
      $region61: #{gmlp_split_forward.1} parent=39 // pred_check
        %p598 = pneg %p313
      $region62: #{gmlp_split_forward.1} parent=39 // pred_check_branch
        %600 = sbr.rel (%p598) target = $region64
      $region63: #{gmlp_split_forward.1} parent=39 // pred_region
        %p601 = scmp.lt.s32.totalorder %s33, 1
        %s602 = scalar_select %p601, %s33, 1
        %s603 = scalar_lea.vmem %s11, %s602
      $region64: #{gmlp_split_forward.1} parent=39 // pred_fallthru
        _
      // Predicated region
      $region65: #{gmlp_split_forward.1} parent=39 // pred_check
        %p604 = pneg %p339
      $region66: #{gmlp_split_forward.1} parent=39 // pred_check_branch
        %606 = sbr.rel (%p604) target = $region68
      $region67: #{gmlp_split_forward.1} parent=39 // pred_region
        %p607 = scmp.lt.s32.totalorder %s33, 1
        %s608 = scalar_select %p607, %s33, 1
        %s609 = scalar_lea.vmem %s12, %s608
      $region68: #{gmlp_split_forward.1} parent=39 // pred_fallthru
        _
      // Predicated region
      $region69: #{gmlp_split_forward.1} parent=39 // pred_check
        %p610 = pneg %p365
      $region70: #{gmlp_split_forward.1} parent=39 // pred_check_branch
        %612 = sbr.rel (%p610) target = $region72
      $region71: #{gmlp_split_forward.1} parent=39 // pred_region
        %p613 = scmp.lt.s32.totalorder %s33, 1
        %s614 = scalar_select %p613, %s33, 1
        %s615 = scalar_lea.vmem %s13, %s614
      $region72: #{gmlp_split_forward.1} parent=39 // pred_fallthru
        _
      // Predicated region
      $region73: #{gmlp_split_forward.1} parent=39 // pred_check
        %p616 = pneg %p391
      $region74: #{gmlp_split_forward.1} parent=39 // pred_check_branch
        %618 = sbr.rel (%p616) target = $region76
      $region75: #{gmlp_split_forward.1} parent=39 // pred_region
        %p619 = scmp.lt.s32.totalorder %s33, 1
        %s620 = scalar_select %p619, %s33, 1
        %s621 = smul.addr %s620, 4
        %s622 = smul.addr %s621, 8
        %s623 = scalar_lea.vmem %s14, %s622
      $region76: #{gmlp_split_forward.1} parent=39 // pred_fallthru
        _
      // Predicated region
      $region77: #{gmlp_split_forward.1} parent=39 // pred_check
        %p624 = pneg %p417
      $region78: #{gmlp_split_forward.1} parent=39 // pred_check_branch
        %626 = sbr.rel (%p624) target = $region80
      $region79: #{gmlp_split_forward.1} parent=39 // pred_region
        %p627 = scmp.lt.s32.totalorder %s33, 1
        %s628 = scalar_select %p627, %s33, 1
        %s629 = smul.addr %s628, 8
        %s630 = scalar_lea.vmem %s15, %s629
      $region80: #{gmlp_split_forward.1} parent=39 // pred_fallthru
        _
      // Predicated region
      $region81: #{gmlp_split_forward.1} parent=39 // pred_check
        %p631 = pneg %p443
      $region82: #{gmlp_split_forward.1} parent=39 // pred_check_branch
        %633 = sbr.rel (%p631) target = $region84
      $region83: #{gmlp_split_forward.1} parent=39 // pred_region
        %p634 = scmp.lt.s32.totalorder %s33, 1
        %s635 = scalar_select %p634, %s33, 1
        %s636 = smul.addr %s635, 7
        %s637 = smul.addr %s636, 8
        %s638 = scalar_lea.vmem %s16, %s637
      $region84: #{gmlp_split_forward.1} parent=39 // pred_fallthru
        _
      // Predicated region
      $region85: #{gmlp_split_forward.1} parent=39 // pred_check
        %p639 = pneg %p469
      $region86: #{gmlp_split_forward.1} parent=39 // pred_check_branch
        %641 = sbr.rel (%p639) target = $region88
      $region87: #{gmlp_split_forward.1} parent=39 // pred_region
        %p642 = scmp.lt.s32.totalorder %s33, 1
        %s643 = scalar_select %p642, %s33, 1
        %s644 = smul.addr %s643, 8
        %s645 = smul.addr %s644, 8
        %s646 = scalar_lea.vmem %s17, %s645
      $region88: #{gmlp_split_forward.1} parent=39 // pred_fallthru
        _
      // Predicated region
      $region89: #{gmlp_split_forward.1} parent=39 // pred_check
        %p647 = pneg %p495
      $region90: #{gmlp_split_forward.1} parent=39 // pred_check_branch
        %649 = sbr.rel (%p647) target = $region92
      $region91: #{gmlp_split_forward.1} parent=39 // pred_region
        %p650 = scmp.lt.s32.totalorder %s33, 1
        %s651 = scalar_select %p650, %s33, 1
        %s652 = scalar_lea.vmem %s18, %s651
      $region92: #{gmlp_split_forward.1} parent=39 // pred_fallthru
        _
    $region40: #{gmlp_split_forward.1} parent=5 // pred_fallthru
      _
    %p653 = scmp.le.s32.totalorder 1, %s25
    %p654 = scmp.lt.s32.totalorder %s25, 5
    %p655 = pnand %p653, %p654
    %p656 = pneg %p655
    // Predicated region
    $region93: #{gmlp_split_forward.1} parent=5 // pred_check
      _
    $region94: #{gmlp_split_forward.1} parent=5 // pred_check_branch
      %658 = sbr.rel (%p655) target = $region96
    $region95: #{gmlp_split_forward.1} parent=5 // pred_region
      %s659 = ssub.s32 %s25, 1
      %p660 = scmp.lt.s32.totalorder %s34, 1
      %s661 = scalar_select %p660, %s34, 1
      %s662 = smul.addr %s661, 8
      %s663 = scalar_lea.vmem %s0, %s662
      %p664 = pneg %p63
      %p665 = pneg %p60
      %p666 = scmp.lt.s32.totalorder %s34, 1
      %s667 = scalar_select %p666, %s34, 1
      %s668 = smul.addr %s667, 8
      %s669 = scalar_lea.vmem %s1, %s668
      %p670 = pneg %p89
      %p671 = pneg %p86
      %p672 = pneg %p110
      %p673 = pneg %p107
      %p674 = pneg %p131
      %p675 = pneg %p128
      %p676 = pneg %p152
      %p677 = pneg %p149
      %p678 = pneg %p173
      %p679 = pneg %p170
      %p680 = pneg %p194
      %p681 = pneg %p191
      %p682 = pneg %p215
      %p683 = pneg %p212
      %p684 = scmp.lt.s32.totalorder %s35, 1
      %s685 = scalar_select %p684, %s35, 1
      %s686 = scalar_lea.vmem %s8, %s685
      %p687 = pneg %p241
      %p688 = pneg %p238
      %p689 = scmp.lt.s32.totalorder %s35, 1
      %s690 = scalar_select %p689, %s35, 1
      %s691 = scalar_lea.vmem %s9, %s690
      %p692 = pneg %p267
      %p693 = pneg %p264
      %p694 = scmp.lt.s32.totalorder %s35, 1
      %s695 = scalar_select %p694, %s35, 1
      %s696 = smul.addr %s695, 8
      %s697 = smul.addr %s696, 8
      %s698 = scalar_lea.vmem %s10, %s697
      %p699 = pneg %p293
      %p700 = pneg %p290
      %p701 = scmp.lt.s32.totalorder %s35, 1
      %s702 = scalar_select %p701, %s35, 1
      %s703 = scalar_lea.vmem %s11, %s702
      %p704 = pneg %p319
      %p705 = pneg %p316
      %p706 = scmp.lt.s32.totalorder %s35, 1
      %s707 = scalar_select %p706, %s35, 1
      %s708 = scalar_lea.vmem %s12, %s707
      %p709 = pneg %p345
      %p710 = pneg %p342
      %p711 = scmp.lt.s32.totalorder %s35, 1
      %s712 = scalar_select %p711, %s35, 1
      %s713 = scalar_lea.vmem %s13, %s712
      %p714 = pneg %p371
      %p715 = pneg %p368
      %p716 = scmp.lt.s32.totalorder %s35, 1
      %s717 = scalar_select %p716, %s35, 1
      %s718 = smul.addr %s717, 4
      %s719 = smul.addr %s718, 8
      %s720 = scalar_lea.vmem %s14, %s719
      %p721 = pneg %p397
      %p722 = pneg %p394
      %p723 = scmp.lt.s32.totalorder %s35, 1
      %s724 = scalar_select %p723, %s35, 1
      %s725 = smul.addr %s724, 8
      %s726 = scalar_lea.vmem %s15, %s725
      %p727 = pneg %p423
      %p728 = pneg %p420
      %p729 = scmp.lt.s32.totalorder %s35, 1
      %s730 = scalar_select %p729, %s35, 1
      %s731 = smul.addr %s730, 7
      %s732 = smul.addr %s731, 8
      %s733 = scalar_lea.vmem %s16, %s732
      %p734 = pneg %p449
      %p735 = pneg %p446
      %p736 = scmp.lt.s32.totalorder %s35, 1
      %s737 = scalar_select %p736, %s35, 1
      %s738 = smul.addr %s737, 8
      %s739 = smul.addr %s738, 8
      %s740 = scalar_lea.vmem %s17, %s739
      %p741 = pneg %p475
      %p742 = pneg %p472
      %p743 = scmp.lt.s32.totalorder %s35, 1
      %s744 = scalar_select %p743, %s35, 1
      %s745 = scalar_lea.vmem %s18, %s744
      %p746 = pneg %p501
      %p747 = pneg %p498
      %p748 = pneg %p527
      %p749 = pneg %p524
      %p750 = scmp.lt.s32.totalorder %s34, 1
      %s751 = scalar_select %p750, %s34, 1
      %s752 = smul.addr %s751, 8
      %s753 = scalar_lea.vmem %s19, %s752
      %p754 = scmp.lt.s32.totalorder %s34, 1
      %s755 = scalar_select %p754, %s34, 1
      %s756 = smul.addr %s755, 8
      %s757 = scalar_lea.vmem %s0, %s756
      %p758 = scmp.lt.s32.totalorder %s34, 1
      %s759 = scalar_select %p758, %s34, 1
      %s760 = smul.addr %s759, 8
      %s761 = scalar_lea.vmem %s1, %s760
      %p762 = scmp.lt.s32.totalorder %s35, 1
      %s763 = scalar_select %p762, %s35, 1
      %s764 = scalar_lea.vmem %s8, %s763
      %p765 = scmp.lt.s32.totalorder %s35, 1
      %s766 = scalar_select %p765, %s35, 1
      %s767 = scalar_lea.vmem %s9, %s766
      %p768 = scmp.lt.s32.totalorder %s35, 1
      %s769 = scalar_select %p768, %s35, 1
      %s770 = smul.addr %s769, 8
      %s771 = smul.addr %s770, 8
      %s772 = scalar_lea.vmem %s10, %s771
      %p773 = scmp.lt.s32.totalorder %s35, 1
      %s774 = scalar_select %p773, %s35, 1
      %s775 = scalar_lea.vmem %s11, %s774
      %p776 = scmp.lt.s32.totalorder %s35, 1
      %s777 = scalar_select %p776, %s35, 1
      %s778 = scalar_lea.vmem %s12, %s777
      %p779 = scmp.lt.s32.totalorder %s35, 1
      %s780 = scalar_select %p779, %s35, 1
      %s781 = scalar_lea.vmem %s13, %s780
      %p782 = scmp.lt.s32.totalorder %s35, 1
      %s783 = scalar_select %p782, %s35, 1
      %s784 = smul.addr %s783, 4
      %s785 = smul.addr %s784, 8
      %s786 = scalar_lea.vmem %s14, %s785
      %p787 = scmp.lt.s32.totalorder %s35, 1
      %s788 = scalar_select %p787, %s35, 1
      %s789 = smul.addr %s788, 8
      %s790 = scalar_lea.vmem %s15, %s789
      %p791 = scmp.lt.s32.totalorder %s35, 1
      %s792 = scalar_select %p791, %s35, 1
      %s793 = smul.addr %s792, 7
      %s794 = smul.addr %s793, 8
      %s795 = scalar_lea.vmem %s16, %s794
      %p796 = scmp.lt.s32.totalorder %s35, 1
      %s797 = scalar_select %p796, %s35, 1
      %s798 = smul.addr %s797, 8
      %s799 = smul.addr %s798, 8
      %s800 = scalar_lea.vmem %s17, %s799
      %p801 = scmp.lt.s32.totalorder %s35, 1
      %s802 = scalar_select %p801, %s35, 1
      %s803 = scalar_lea.vmem %s18, %s802
      %p804 = scmp.lt.s32.totalorder %s34, 1
      %s805 = scalar_select %p804, %s34, 1
      %s806 = smul.addr %s805, 8
      %s807 = scalar_lea.vmem %s19, %s806
      %v808 = vld [vmem:[%s2] sm:$0xff]
      %v809 = vld [vmem:[%s2 + $0x8] sm:$0xff]
      %v810 = vld [vmem:[%s2 + $0x10] sm:$0xff]
      %v811 = vld [vmem:[%s2 + $0x18] sm:$0xff]
      %v812 = vld [vmem:[%s2 + $0x20] sm:$0xff]
      %v813 = vld [vmem:[%s2 + $0x28] sm:$0xff]
      %v814 = vld [vmem:[%s2 + $0x30] sm:$0xff]
      %v815 = vld [vmem:[%s2 + $0x38] sm:$0xff]
      %p816 = scmp.eq.s32.totalorder %s35, 0
      // Predicated region
      $region97: #{gmlp_split_forward.1} parent=95 // pred_check
        %p817 = pneg %p816
      $region98: #{gmlp_split_forward.1} parent=95 // pred_check_branch
        %819 = sbr.rel (%p817) target = $region100
      $region99: #{gmlp_split_forward.1} parent=95 // pred_region
        %v820 = vld [vmem:[%s757] sm:$0xff]
        %vm821 = vcmask 523264
        %822 = vst.msk [vmem:[#allocation2] sm:$0xff] %vm821, %v820
        %v823 = vld [vmem:[%s761] sm:$0xff]
        %v824 = vsub.f32 1.0, %v823
        %826 = vset.pattern.permute.xlu0 0
        %827 = vperm.xlu0 %826, %v824
        %v828 = vpop.permute.xlu0 %827
        %vm830 = vcmask 261120
        %831 = vst.msk [vmem:[#allocation3] sm:$0xff] %vm830, %v828
        %832 = vset.pattern.permute.xlu0 1
        %833 = vperm.xlu0 %832, %v824
        %v834 = vpop.permute.xlu0 %833
        %s836 = scalar_lea.vmem [#allocation3], 8
        %837 = vst.msk [vmem:[%s836] sm:$0xff] %vm830, %v834
        %838 = vset.pattern.permute.xlu0 2
        %839 = vperm.xlu0 %838, %v824
        %v840 = vpop.permute.xlu0 %839
        %s842 = scalar_lea.vmem [#allocation3], 16
        %843 = vst.msk [vmem:[%s842] sm:$0xff] %vm830, %v840
        %844 = vset.pattern.permute.xlu0 3
        %845 = vperm.xlu0 %844, %v824
        %v846 = vpop.permute.xlu0 %845
        %s848 = scalar_lea.vmem [#allocation3], 24
        %849 = vst.msk [vmem:[%s848] sm:$0xff] %vm830, %v846
        %850 = vset.pattern.permute.xlu0 4
        %851 = vperm.xlu0 %850, %v824
        %v852 = vpop.permute.xlu0 %851
        %s854 = scalar_lea.vmem [#allocation3], 32
        %855 = vst.msk [vmem:[%s854] sm:$0xff] %vm830, %v852
        %856 = vset.pattern.permute.xlu0 5
        %857 = vperm.xlu0 %856, %v824
        %v858 = vpop.permute.xlu0 %857
        %s860 = scalar_lea.vmem [#allocation3], 40
        %861 = vst.msk [vmem:[%s860] sm:$0xff] %vm830, %v858
        %862 = vset.pattern.permute.xlu0 6
        %863 = vperm.xlu0 %862, %v824
        %v864 = vpop.permute.xlu0 %863
        %s866 = scalar_lea.vmem [#allocation3], 48
        %867 = vst.msk [vmem:[%s866] sm:$0xff] %vm830, %v864
      $region100: #{gmlp_split_forward.1} parent=95 // pred_fallthru
        _
      %v868 = vld [vmem:[#allocation2] sm:$0xff]
      %vm869 = vcmask 523264
      %v871 = vsel %vm869, %v868, 0
      %873 = vmatprep.subr.mxu0 0.0
      %874 = vmatpush1.msra.mxu0 0.0
      %875 = vmatprep.subr.mxu0 0.0
      %876 = vmatpush1.msra.mxu0 0.0
      %877 = vmatprep.subr.mxu0 0.0
      %878 = vmatpush1.msra.mxu0 0.0
      %879 = vmatprep.subr.mxu0 0.0
      %880 = vmatpush1.msra.mxu0 0.0
      %881 = vmatprep.subr.mxu0 0.0
      %882 = vmatpush1.msra.mxu0 0.0
      %883 = vmatprep.subr.mxu0 0.0
      %884 = vmatpush1.msra.mxu0 0.0
      %885 = vmatprep.subr.mxu0 0.0
      %886 = vmatpush1.msra.mxu0 0.0
      %887 = vmatprep.subr.mxu0 0.0
      %888 = vmatpush1.msra.mxu0 0.0
      %889 = vmatprep.subr.mxu0 0.0
      %890 = vmatpush1.msra.mxu0 %v815
      %891 = vmatprep.subr.mxu0 0.0
      %892 = vmatpush1.msra.mxu0 %v814
      %893 = vmatprep.subr.mxu0 0.0
      %894 = vmatpush1.msra.mxu0 %v813
      %895 = vmatprep.subr.mxu0 0.0
      %896 = vmatpush1.msra.mxu0 %v812
      %897 = vmatprep.subr.mxu0 0.0
      %898 = vmatpush1.msra.mxu0 %v811
      %899 = vmatprep.subr.mxu0 0.0
      %900 = vmatpush1.msra.mxu0 %v810
      %901 = vmatprep.subr.mxu0 0.0
      %902 = vmatpush1.msra.mxu0 %v809
      %903 = vmatprep.subr.mxu0 0.0
      %904 = vmatpush1.msra.mxu0 %v808
      %905 = vmatprep.subr.mxu0 0.0
      %906 = vmatpush2.msra.mxu0 0.0
      %907 = vmatprep.subr.mxu0 0.0
      %908 = vmatpush2.msra.mxu0 0.0
      %909 = vmatprep.subr.mxu0 0.0
      %910 = vmatpush2.msra.mxu0 0.0
      %911 = vmatprep.subr.mxu0 0.0
      %912 = vmatpush2.msra.mxu0 0.0
      %913 = vmatprep.subr.mxu0 0.0
      %914 = vmatpush2.msra.mxu0 0.0
      %915 = vmatprep.subr.mxu0 0.0
      %916 = vmatpush2.msra.mxu0 0.0
      %917 = vmatprep.subr.mxu0 0.0
      %918 = vmatpush2.msra.mxu0 0.0
      %919 = vmatprep.subr.mxu0 0.0
      %920 = vmatpush2.msra.mxu0 0.0
      %921 = vmatprep.subr.mxu0 0.0
      %922 = vmatpush2.msra.mxu0 0.0
      %923 = vmatprep.subr.mxu0 0.0
      %924 = vmatpush2.msra.mxu0 0.0
      %925 = vmatprep.subr.mxu0 0.0
      %926 = vmatpush2.msra.mxu0 0.0
      %927 = vmatprep.subr.mxu0 0.0
      %928 = vmatpush2.msra.mxu0 0.0
      %929 = vmatprep.subr.mxu0 0.0
      %930 = vmatpush2.msra.mxu0 0.0
      %931 = vmatprep.subr.mxu0 0.0
      %932 = vmatpush2.msra.mxu0 0.0
      %933 = vmatprep.subr.mxu0 0.0
      %934 = vmatpush2.msra.mxu0 0.0
      %935 = vmatprep.subr.mxu0 0.0
      %936 = vmatpush2.msra.mxu0 0.0
      %937 = vmatprep.mubr.f32.mxu0 0.0
      %938 = vmatmul.mubr.f32.gmra.mxu0 %v871
      %v939 = vpop.f32.mrf.mxu0
      %v940 = vadd.f32 0.0, %v939
      %v941 = vpop.f32.mrf.mxu0
      %942 = vdwg.mxu0
      %v943 = vsub.f32 %v868, %v940
      %v944 = vmul.f32 %v943, %v943
      %v946 = vsel %vm869, %v944, 0
      %948 = vmatprep.subr.mxu0 0.0
      %949 = vmatpush1.msra.mxu0 0.0
      %950 = vmatprep.subr.mxu0 0.0
      %951 = vmatpush1.msra.mxu0 0.0
      %952 = vmatprep.subr.mxu0 0.0
      %953 = vmatpush1.msra.mxu0 0.0
      %954 = vmatprep.subr.mxu0 0.0
      %955 = vmatpush1.msra.mxu0 0.0
      %956 = vmatprep.subr.mxu0 0.0
      %957 = vmatpush1.msra.mxu0 0.0
      %958 = vmatprep.subr.mxu0 0.0
      %959 = vmatpush1.msra.mxu0 0.0
      %960 = vmatprep.subr.mxu0 0.0
      %961 = vmatpush1.msra.mxu0 0.0
      %962 = vmatprep.subr.mxu0 0.0
      %963 = vmatpush1.msra.mxu0 0.0
      %964 = vmatprep.subr.mxu0 0.0
      %965 = vmatpush1.msra.mxu0 %v815
      %966 = vmatprep.subr.mxu0 0.0
      %967 = vmatpush1.msra.mxu0 %v814
      %968 = vmatprep.subr.mxu0 0.0
      %969 = vmatpush1.msra.mxu0 %v813
      %970 = vmatprep.subr.mxu0 0.0
      %971 = vmatpush1.msra.mxu0 %v812
      %972 = vmatprep.subr.mxu0 0.0
      %973 = vmatpush1.msra.mxu0 %v811
      %974 = vmatprep.subr.mxu0 0.0
      %975 = vmatpush1.msra.mxu0 %v810
      %976 = vmatprep.subr.mxu0 0.0
      %977 = vmatpush1.msra.mxu0 %v809
      %978 = vmatprep.subr.mxu0 0.0
      %979 = vmatpush1.msra.mxu0 %v808
      %980 = vmatprep.subr.mxu0 0.0
      %981 = vmatpush2.msra.mxu0 0.0
      %982 = vmatprep.subr.mxu0 0.0
      %983 = vmatpush2.msra.mxu0 0.0
      %984 = vmatprep.subr.mxu0 0.0
      %985 = vmatpush2.msra.mxu0 0.0
      %986 = vmatprep.subr.mxu0 0.0
      %987 = vmatpush2.msra.mxu0 0.0
      %988 = vmatprep.subr.mxu0 0.0
      %989 = vmatpush2.msra.mxu0 0.0
      %990 = vmatprep.subr.mxu0 0.0
      %991 = vmatpush2.msra.mxu0 0.0
      %992 = vmatprep.subr.mxu0 0.0
      %993 = vmatpush2.msra.mxu0 0.0
      %994 = vmatprep.subr.mxu0 0.0
      %995 = vmatpush2.msra.mxu0 0.0
      %996 = vmatprep.subr.mxu0 0.0
      %997 = vmatpush2.msra.mxu0 0.0
      %998 = vmatprep.subr.mxu0 0.0
      %999 = vmatpush2.msra.mxu0 0.0
      %1000 = vmatprep.subr.mxu0 0.0
      %1001 = vmatpush2.msra.mxu0 0.0
      %1002 = vmatprep.subr.mxu0 0.0
      %1003 = vmatpush2.msra.mxu0 0.0
      %1004 = vmatprep.subr.mxu0 0.0
      %1005 = vmatpush2.msra.mxu0 0.0
      %1006 = vmatprep.subr.mxu0 0.0
      %1007 = vmatpush2.msra.mxu0 0.0
      %1008 = vmatprep.subr.mxu0 0.0
      %1009 = vmatpush2.msra.mxu0 0.0
      %1010 = vmatprep.subr.mxu0 0.0
      %1011 = vmatpush2.msra.mxu0 0.0
      %1012 = vmatprep.mubr.f32.mxu0 0.0
      %1013 = vmatmul.mubr.f32.gmra.mxu0 %v946
      %v1014 = vpop.f32.mrf.mxu0
      %v1015 = vadd.f32 1e-05, %v1014
      %v1016 = vpop.f32.mrf.mxu0
      %1017 = vdwg.mxu0
      %v1018 = vrsqrt.pop %v1015
      %v1019 = vmul.f32 %v943, %v1018
      %v1020 = vld [vmem:[%s764] sm:$0x1]
      %v1022 = vlaneseq
      %v1023 = vshrl.u32 %v1022, 7
      %v1024 = vsub.s32 0, %v1023
      %v1025 = vrot.slane %v1020, %v1024
      %v1027 = vmul.f32 %v1019, %v1025
      %v1028 = vld [vmem:[%s767] sm:$0x1]
      %v1030 = vlaneseq
      %v1031 = vshrl.u32 %v1030, 7
      %v1032 = vsub.s32 0, %v1031
      %v1033 = vrot.slane %v1028, %v1032
      %v1035 = vadd.f32 %v1027, %v1033
      %v1036 = vld [vmem:[%s772] sm:$0xff]
      %v1037 = vld [vmem:[%s772 + $0x8] sm:$0xff]
      %v1038 = vld [vmem:[%s772 + $0x10] sm:$0xff]
      %v1039 = vld [vmem:[%s772 + $0x18] sm:$0xff]
      %v1040 = vld [vmem:[%s772 + $0x20] sm:$0xff]
      %v1041 = vld [vmem:[%s772 + $0x28] sm:$0xff]
      %v1042 = vld [vmem:[%s772 + $0x30] sm:$0xff]
      %v1043 = vld [vmem:[%s772 + $0x38] sm:$0xff]
      %v1044 = vld [vmem:[%s775] sm:$0x1]
      %v1046 = vlaneseq
      %v1047 = vshrl.u32 %v1046, 7
      %v1048 = vsub.s32 0, %v1047
      %v1049 = vrot.slane %v1044, %v1048
      %v1052 = vsel %vm869, %v1035, 0
      %1054 = vmatprep.subr.mxu0 0.0
      %1055 = vmatpush1.msra.mxu0 0.0
      %1056 = vmatprep.subr.mxu0 0.0
      %1057 = vmatpush1.msra.mxu0 0.0
      %1058 = vmatprep.subr.mxu0 0.0
      %1059 = vmatpush1.msra.mxu0 0.0
      %1060 = vmatprep.subr.mxu0 0.0
      %1061 = vmatpush1.msra.mxu0 0.0
      %1062 = vmatprep.subr.mxu0 0.0
      %1063 = vmatpush1.msra.mxu0 0.0
      %1064 = vmatprep.subr.mxu0 0.0
      %1065 = vmatpush1.msra.mxu0 0.0
      %1066 = vmatprep.subr.mxu0 0.0
      %1067 = vmatpush1.msra.mxu0 0.0
      %1068 = vmatprep.subr.mxu0 0.0
      %1069 = vmatpush1.msra.mxu0 0.0
      %1070 = vmatprep.subr.mxu0 0.0
      %1071 = vmatpush1.msra.mxu0 %v1043
      %1072 = vmatprep.subr.mxu0 0.0
      %1073 = vmatpush1.msra.mxu0 %v1042
      %1074 = vmatprep.subr.mxu0 0.0
      %1075 = vmatpush1.msra.mxu0 %v1041
      %1076 = vmatprep.subr.mxu0 0.0
      %1077 = vmatpush1.msra.mxu0 %v1040
      %1078 = vmatprep.subr.mxu0 0.0
      %1079 = vmatpush1.msra.mxu0 %v1039
      %1080 = vmatprep.subr.mxu0 0.0
      %1081 = vmatpush1.msra.mxu0 %v1038
      %1082 = vmatprep.subr.mxu0 0.0
      %1083 = vmatpush1.msra.mxu0 %v1037
      %1084 = vmatprep.subr.mxu0 0.0
      %1085 = vmatpush1.msra.mxu0 %v1036
      %1086 = vmatprep.subr.mxu0 0.0
      %1087 = vmatpush2.msra.mxu0 0.0
      %1088 = vmatprep.subr.mxu0 0.0
      %1089 = vmatpush2.msra.mxu0 0.0
      %1090 = vmatprep.subr.mxu0 0.0
      %1091 = vmatpush2.msra.mxu0 0.0
      %1092 = vmatprep.subr.mxu0 0.0
      %1093 = vmatpush2.msra.mxu0 0.0
      %1094 = vmatprep.subr.mxu0 0.0
      %1095 = vmatpush2.msra.mxu0 0.0
      %1096 = vmatprep.subr.mxu0 0.0
      %1097 = vmatpush2.msra.mxu0 0.0
      %1098 = vmatprep.subr.mxu0 0.0
      %1099 = vmatpush2.msra.mxu0 0.0
      %1100 = vmatprep.subr.mxu0 0.0
      %1101 = vmatpush2.msra.mxu0 0.0
      %1102 = vmatprep.subr.mxu0 0.0
      %1103 = vmatpush2.msra.mxu0 0.0
      %1104 = vmatprep.subr.mxu0 0.0
      %1105 = vmatpush2.msra.mxu0 0.0
      %1106 = vmatprep.subr.mxu0 0.0
      %1107 = vmatpush2.msra.mxu0 0.0
      %1108 = vmatprep.subr.mxu0 0.0
      %1109 = vmatpush2.msra.mxu0 0.0
      %1110 = vmatprep.subr.mxu0 0.0
      %1111 = vmatpush2.msra.mxu0 0.0
      %1112 = vmatprep.subr.mxu0 0.0
      %1113 = vmatpush2.msra.mxu0 0.0
      %1114 = vmatprep.subr.mxu0 0.0
      %1115 = vmatpush2.msra.mxu0 0.0
      %1116 = vmatprep.subr.mxu0 0.0
      %1117 = vmatpush2.msra.mxu0 0.0
      %1118 = vmatprep.mubr.f32.mxu0 0.0
      %1119 = vmatmul.mubr.f32.gmra.mxu0 %v1052
      %v1120 = vpop.f32.mrf.mxu0
      %v1121 = vadd.f32 %v1049, %v1120
      %v1122 = vpop.f32.mrf.mxu0
      %1123 = vdwg.mxu0
      %v1124 = vmul.f32 %v1121, 0.5
      %v1125 = vmul.f32 %v1121, 0.044715
      %v1126 = vmul.f32 %v1125, %v1121
      %v1127 = vmul.f32 %v1126, %v1121
      %v1128 = vadd.f32 %v1121, %v1127
      %v1129 = vmul.f32 %v1128, 0.7978846
      %v1130 = vtanh.pop %v1129
      %v1131 = vadd.f32 %v1130, 1.0
      %v1132 = vmul.f32 %v1124, %v1131
      %1134 = vrot.lane.b32.xlu0 %v1132, 96
      %v1135 = vpop.permute.xlu0 %1134
      %vm1137 = vcmask 261120
      %v1138 = vsel %vm1137, %v1135, 0.0
      %1139 = vadd.xlane.f32.xlu0 %v1138
      %v1140 = vpop.xlane.xlu0 %1139
      %v1141 = vrcp.pop 32.0
      %v1142 = vmul.f32 %v1140, %v1141
      %v1143 = vsub.f32 %v1132, %v1142
      %v1144 = vmul.f32 %v1143, %v1143
      %1146 = vrot.lane.b32.xlu0 %v1144, 96
      %v1147 = vpop.permute.xlu0 %1146
      %v1149 = vsel %vm1137, %v1147, 0.0
      %1150 = vadd.xlane.f32.xlu0 %v1149
      %v1151 = vpop.xlane.xlu0 %1150
      %v1152 = vmul.f32 %v1151, %v1141
      %v1153 = vadd.f32 %v1152, 1e-05
      %v1154 = vrsqrt.pop %v1153
      %v1155 = vmul.f32 %v1143, %v1154
      %v1156 = vld [vmem:[%s778] sm:$0x1]
      %v1158 = vlaneseq
      %v1159 = vshrl.u32 %v1158, 7
      %v1160 = vsub.s32 0, %v1159
      %v1161 = vrot.slane %v1156, %v1160
      %1162 = vrot.lane.b32.xlu0 %v1161, 32
      %v1163 = vpop.permute.xlu0 %1162
      %v1165 = vmul.f32 %v1155, %v1163
      %v1166 = vld [vmem:[%s781] sm:$0x1]
      %v1168 = vlaneseq
      %v1169 = vshrl.u32 %v1168, 7
      %v1170 = vsub.s32 0, %v1169
      %v1171 = vrot.slane %v1166, %v1170
      %1172 = vrot.lane.b32.xlu0 %v1171, 32
      %v1173 = vpop.permute.xlu0 %1172
      %v1175 = vadd.f32 %v1165, %v1173
      %v1176 = vld [vmem:[#allocation3] sm:$0xff]
      %v1177 = vld [vmem:[%s795] sm:$0xff]
      %v1178 = vmul.f32 %v1176, %v1177
      %s1179 = scalar_lea.vmem [#allocation3], 8
      %v1180 = vld [vmem:[%s1179] sm:$0xff]
      %s1181 = scalar_lea.vmem %s795, 8
      %v1182 = vld [vmem:[%s1181] sm:$0xff]
      %v1183 = vmul.f32 %v1180, %v1182
      %v1184 = vadd.f32 %v1178, %v1183
      %s1185 = scalar_lea.vmem [#allocation3], 16
      %v1186 = vld [vmem:[%s1185] sm:$0xff]
      %s1187 = scalar_lea.vmem %s795, 16
      %v1188 = vld [vmem:[%s1187] sm:$0xff]
      %v1189 = vmul.f32 %v1186, %v1188
      %v1190 = vadd.f32 %v1184, %v1189
      %s1191 = scalar_lea.vmem [#allocation3], 24
      %v1192 = vld [vmem:[%s1191] sm:$0xff]
      %s1193 = scalar_lea.vmem %s795, 24
      %v1194 = vld [vmem:[%s1193] sm:$0xff]
      %v1195 = vmul.f32 %v1192, %v1194
      %v1196 = vadd.f32 %v1190, %v1195
      %s1197 = scalar_lea.vmem [#allocation3], 32
      %v1198 = vld [vmem:[%s1197] sm:$0xff]
      %s1199 = scalar_lea.vmem %s795, 32
      %v1200 = vld [vmem:[%s1199] sm:$0xff]
      %v1201 = vmul.f32 %v1198, %v1200
      %v1202 = vadd.f32 %v1196, %v1201
      %s1203 = scalar_lea.vmem [#allocation3], 40
      %v1204 = vld [vmem:[%s1203] sm:$0xff]
      %s1205 = scalar_lea.vmem %s795, 40
      %v1206 = vld [vmem:[%s1205] sm:$0xff]
      %v1207 = vmul.f32 %v1204, %v1206
      %v1208 = vadd.f32 %v1202, %v1207
      %s1209 = scalar_lea.vmem [#allocation3], 48
      %v1210 = vld [vmem:[%s1209] sm:$0xff]
      %s1211 = scalar_lea.vmem %s795, 48
      %v1212 = vld [vmem:[%s1211] sm:$0xff]
      %v1213 = vmul.f32 %v1210, %v1212
      %v1214 = vadd.f32 %v1208, %v1213
      %1216 = vrot.lane.b32.xlu0 %v1214, 32
      %v1217 = vpop.permute.xlu0 %1216
      %v1219 = vadd.f32 %v1175, %v1217
      %v1220 = vld [vmem:[%s3] sm:$0x1]
      %v1221 = vld [vmem:[%s786] sm:$0xff]
      %1223 = vrot.lane.b32.xlu0 %v1219, 96
      %v1224 = vpop.permute.xlu0 %1223
      %vm1226 = vcmask 64512
      %v1228 = vsel %vm1226, %v1221, 0
      %1230 = vmatprep.subr.mxu0 0.0
      %1231 = vmatpush1.msra.mxu0 0.0
      %1232 = vmatprep.subr.mxu0 0.0
      %1233 = vmatpush1.msra.mxu0 0.0
      %1234 = vmatprep.subr.mxu0 0.0
      %1235 = vmatpush1.msra.mxu0 0.0
      %1236 = vmatprep.subr.mxu0 0.0
      %1237 = vmatpush1.msra.mxu0 0.0
      %1238 = vmatprep.subr.mxu0 0.0
      %1239 = vmatpush1.msra.mxu0 0.0
      %1240 = vmatprep.subr.mxu0 0.0
      %1241 = vmatpush1.msra.mxu0 0.0
      %1242 = vmatprep.subr.mxu0 0.0
      %1243 = vmatpush1.msra.mxu0 0.0
      %1244 = vmatprep.subr.mxu0 0.0
      %1245 = vmatpush1.msra.mxu0 0.0
      %1246 = vmatprep.subr.mxu0 0.0
      %1247 = vmatpush1.msra.mxu0 0.0
      %1248 = vmatprep.subr.mxu0 0.0
      %1249 = vmatpush1.msra.mxu0 0.0
      %1250 = vmatprep.subr.mxu0 0.0
      %1251 = vmatpush1.msra.mxu0 0.0
      %1252 = vmatprep.subr.mxu0 0.0
      %1253 = vmatpush1.msra.mxu0 0.0
      %1254 = vmatprep.subr.mxu0 0.0
      %1255 = vmatpush1.msra.mxu0 0.0
      %1256 = vmatprep.subr.mxu0 0.0
      %1257 = vmatpush1.msra.mxu0 0.0
      %1258 = vmatprep.subr.mxu0 0.0
      %1259 = vmatpush1.msra.mxu0 0.0
      %1260 = vmatprep.subr.mxu0 0.0
      %1261 = vmatpush1.msra.mxu0 %v1224
      %1262 = vmatprep.subr.mxu0 0.0
      %1263 = vmatpush2.msra.mxu0 0.0
      %1264 = vmatprep.subr.mxu0 0.0
      %1265 = vmatpush2.msra.mxu0 0.0
      %1266 = vmatprep.subr.mxu0 0.0
      %1267 = vmatpush2.msra.mxu0 0.0
      %1268 = vmatprep.subr.mxu0 0.0
      %1269 = vmatpush2.msra.mxu0 0.0
      %1270 = vmatprep.subr.mxu0 0.0
      %1271 = vmatpush2.msra.mxu0 0.0
      %1272 = vmatprep.subr.mxu0 0.0
      %1273 = vmatpush2.msra.mxu0 0.0
      %1274 = vmatprep.subr.mxu0 0.0
      %1275 = vmatpush2.msra.mxu0 0.0
      %1276 = vmatprep.subr.mxu0 0.0
      %1277 = vmatpush2.msra.mxu0 0.0
      %1278 = vmatprep.subr.mxu0 0.0
      %1279 = vmatpush2.msra.mxu0 0.0
      %1280 = vmatprep.subr.mxu0 0.0
      %1281 = vmatpush2.msra.mxu0 0.0
      %1282 = vmatprep.subr.mxu0 0.0
      %1283 = vmatpush2.msra.mxu0 0.0
      %1284 = vmatprep.subr.mxu0 0.0
      %1285 = vmatpush2.msra.mxu0 0.0
      %1286 = vmatprep.subr.mxu0 0.0
      %1287 = vmatpush2.msra.mxu0 0.0
      %1288 = vmatprep.subr.mxu0 0.0
      %1289 = vmatpush2.msra.mxu0 0.0
      %1290 = vmatprep.subr.mxu0 0.0
      %1291 = vmatpush2.msra.mxu0 0.0
      %1292 = vmatprep.subr.mxu0 0.0
      %1293 = vmatpush2.msra.mxu0 0.0
      %1294 = vmatprep.mubr.f32.mxu0 0.0
      %1295 = vmatmul.mubr.f32.gmra.mxu0 %v1228
      %v1296 = vpop.f32.mrf.mxu0
      %v1297 = vadd.f32 0.0, %v1296
      %v1298 = vpop.f32.mrf.mxu0
      %1299 = vdwg.mxu0
      %v1301 = vlaneseq
      %v1302 = vshrl.u32 %v1301, 7
      %v1303 = vsub.s32 0, %v1302
      %v1304 = vrot.slane %v1220, %v1303
      %v1306 = vmul.f32 %v1304, %v1297
      %s1307 = scalar_lea.vmem %s3, 1
      %v1308 = vld [vmem:[%s1307] sm:$0x1]
      %s1309 = scalar_lea.vmem %s786, 8
      %v1310 = vld [vmem:[%s1309] sm:$0xff]
      %v1312 = vsel %vm1226, %v1310, 0
      %1314 = vmatprep.subr.mxu0 0.0
      %1315 = vmatpush1.msra.mxu0 0.0
      %1316 = vmatprep.subr.mxu0 0.0
      %1317 = vmatpush1.msra.mxu0 0.0
      %1318 = vmatprep.subr.mxu0 0.0
      %1319 = vmatpush1.msra.mxu0 0.0
      %1320 = vmatprep.subr.mxu0 0.0
      %1321 = vmatpush1.msra.mxu0 0.0
      %1322 = vmatprep.subr.mxu0 0.0
      %1323 = vmatpush1.msra.mxu0 0.0
      %1324 = vmatprep.subr.mxu0 0.0
      %1325 = vmatpush1.msra.mxu0 0.0
      %1326 = vmatprep.subr.mxu0 0.0
      %1327 = vmatpush1.msra.mxu0 0.0
      %1328 = vmatprep.subr.mxu0 0.0
      %1329 = vmatpush1.msra.mxu0 0.0
      %1330 = vmatprep.subr.mxu0 0.0
      %1331 = vmatpush1.msra.mxu0 0.0
      %1332 = vmatprep.subr.mxu0 0.0
      %1333 = vmatpush1.msra.mxu0 0.0
      %1334 = vmatprep.subr.mxu0 0.0
      %1335 = vmatpush1.msra.mxu0 0.0
      %1336 = vmatprep.subr.mxu0 0.0
      %1337 = vmatpush1.msra.mxu0 0.0
      %1338 = vmatprep.subr.mxu0 0.0
      %1339 = vmatpush1.msra.mxu0 0.0
      %1340 = vmatprep.subr.mxu0 0.0
      %1341 = vmatpush1.msra.mxu0 0.0
      %1342 = vmatprep.subr.mxu0 0.0
      %1343 = vmatpush1.msra.mxu0 0.0
      %1344 = vmatprep.subr.mxu0 0.0
      %1345 = vmatpush1.msra.mxu0 %v1224
      %1346 = vmatprep.subr.mxu0 0.0
      %1347 = vmatpush2.msra.mxu0 0.0
      %1348 = vmatprep.subr.mxu0 0.0
      %1349 = vmatpush2.msra.mxu0 0.0
      %1350 = vmatprep.subr.mxu0 0.0
      %1351 = vmatpush2.msra.mxu0 0.0
      %1352 = vmatprep.subr.mxu0 0.0
      %1353 = vmatpush2.msra.mxu0 0.0
      %1354 = vmatprep.subr.mxu0 0.0
      %1355 = vmatpush2.msra.mxu0 0.0
      %1356 = vmatprep.subr.mxu0 0.0
      %1357 = vmatpush2.msra.mxu0 0.0
      %1358 = vmatprep.subr.mxu0 0.0
      %1359 = vmatpush2.msra.mxu0 0.0
      %1360 = vmatprep.subr.mxu0 0.0
      %1361 = vmatpush2.msra.mxu0 0.0
      %1362 = vmatprep.subr.mxu0 0.0
      %1363 = vmatpush2.msra.mxu0 0.0
      %1364 = vmatprep.subr.mxu0 0.0
      %1365 = vmatpush2.msra.mxu0 0.0
      %1366 = vmatprep.subr.mxu0 0.0
      %1367 = vmatpush2.msra.mxu0 0.0
      %1368 = vmatprep.subr.mxu0 0.0
      %1369 = vmatpush2.msra.mxu0 0.0
      %1370 = vmatprep.subr.mxu0 0.0
      %1371 = vmatpush2.msra.mxu0 0.0
      %1372 = vmatprep.subr.mxu0 0.0
      %1373 = vmatpush2.msra.mxu0 0.0
      %1374 = vmatprep.subr.mxu0 0.0
      %1375 = vmatpush2.msra.mxu0 0.0
      %1376 = vmatprep.subr.mxu0 0.0
      %1377 = vmatpush2.msra.mxu0 0.0
      %1378 = vmatprep.mubr.f32.mxu0 0.0
      %1379 = vmatmul.mubr.f32.gmra.mxu0 %v1312
      %v1380 = vpop.f32.mrf.mxu0
      %v1381 = vadd.f32 0.0, %v1380
      %v1382 = vpop.f32.mrf.mxu0
      %1383 = vdwg.mxu0
      %v1385 = vlaneseq
      %v1386 = vshrl.u32 %v1385, 7
      %v1387 = vsub.s32 0, %v1386
      %v1388 = vrot.slane %v1308, %v1387
      %v1390 = vmul.f32 %v1388, %v1381
      %v1391 = vadd.f32 %v1306, %v1390
      %s1392 = scalar_lea.vmem %s3, 2
      %v1393 = vld [vmem:[%s1392] sm:$0x1]
      %s1394 = scalar_lea.vmem %s786, 16
      %v1395 = vld [vmem:[%s1394] sm:$0xff]
      %v1397 = vsel %vm1226, %v1395, 0
      %1399 = vmatprep.subr.mxu0 0.0
      %1400 = vmatpush1.msra.mxu0 0.0
      %1401 = vmatprep.subr.mxu0 0.0
      %1402 = vmatpush1.msra.mxu0 0.0
      %1403 = vmatprep.subr.mxu0 0.0
      %1404 = vmatpush1.msra.mxu0 0.0
      %1405 = vmatprep.subr.mxu0 0.0
      %1406 = vmatpush1.msra.mxu0 0.0
      %1407 = vmatprep.subr.mxu0 0.0
      %1408 = vmatpush1.msra.mxu0 0.0
      %1409 = vmatprep.subr.mxu0 0.0
      %1410 = vmatpush1.msra.mxu0 0.0
      %1411 = vmatprep.subr.mxu0 0.0
      %1412 = vmatpush1.msra.mxu0 0.0
      %1413 = vmatprep.subr.mxu0 0.0
      %1414 = vmatpush1.msra.mxu0 0.0
      %1415 = vmatprep.subr.mxu0 0.0
      %1416 = vmatpush1.msra.mxu0 0.0
      %1417 = vmatprep.subr.mxu0 0.0
      %1418 = vmatpush1.msra.mxu0 0.0
      %1419 = vmatprep.subr.mxu0 0.0
      %1420 = vmatpush1.msra.mxu0 0.0
      %1421 = vmatprep.subr.mxu0 0.0
      %1422 = vmatpush1.msra.mxu0 0.0
      %1423 = vmatprep.subr.mxu0 0.0
      %1424 = vmatpush1.msra.mxu0 0.0
      %1425 = vmatprep.subr.mxu0 0.0
      %1426 = vmatpush1.msra.mxu0 0.0
      %1427 = vmatprep.subr.mxu0 0.0
      %1428 = vmatpush1.msra.mxu0 0.0
      %1429 = vmatprep.subr.mxu0 0.0
      %1430 = vmatpush1.msra.mxu0 %v1224
      %1431 = vmatprep.subr.mxu0 0.0
      %1432 = vmatpush2.msra.mxu0 0.0
      %1433 = vmatprep.subr.mxu0 0.0
      %1434 = vmatpush2.msra.mxu0 0.0
      %1435 = vmatprep.subr.mxu0 0.0
      %1436 = vmatpush2.msra.mxu0 0.0
      %1437 = vmatprep.subr.mxu0 0.0
      %1438 = vmatpush2.msra.mxu0 0.0
      %1439 = vmatprep.subr.mxu0 0.0
      %1440 = vmatpush2.msra.mxu0 0.0
      %1441 = vmatprep.subr.mxu0 0.0
      %1442 = vmatpush2.msra.mxu0 0.0
      %1443 = vmatprep.subr.mxu0 0.0
      %1444 = vmatpush2.msra.mxu0 0.0
      %1445 = vmatprep.subr.mxu0 0.0
      %1446 = vmatpush2.msra.mxu0 0.0
      %1447 = vmatprep.subr.mxu0 0.0
      %1448 = vmatpush2.msra.mxu0 0.0
      %1449 = vmatprep.subr.mxu0 0.0
      %1450 = vmatpush2.msra.mxu0 0.0
      %1451 = vmatprep.subr.mxu0 0.0
      %1452 = vmatpush2.msra.mxu0 0.0
      %1453 = vmatprep.subr.mxu0 0.0
      %1454 = vmatpush2.msra.mxu0 0.0
      %1455 = vmatprep.subr.mxu0 0.0
      %1456 = vmatpush2.msra.mxu0 0.0
      %1457 = vmatprep.subr.mxu0 0.0
      %1458 = vmatpush2.msra.mxu0 0.0
      %1459 = vmatprep.subr.mxu0 0.0
      %1460 = vmatpush2.msra.mxu0 0.0
      %1461 = vmatprep.subr.mxu0 0.0
      %1462 = vmatpush2.msra.mxu0 0.0
      %1463 = vmatprep.mubr.f32.mxu0 0.0
      %1464 = vmatmul.mubr.f32.gmra.mxu0 %v1397
      %v1465 = vpop.f32.mrf.mxu0
      %v1466 = vadd.f32 0.0, %v1465
      %v1467 = vpop.f32.mrf.mxu0
      %1468 = vdwg.mxu0
      %v1470 = vlaneseq
      %v1471 = vshrl.u32 %v1470, 7
      %v1472 = vsub.s32 0, %v1471
      %v1473 = vrot.slane %v1393, %v1472
      %v1475 = vmul.f32 %v1473, %v1466
      %v1476 = vadd.f32 %v1391, %v1475
      %s1477 = scalar_lea.vmem %s3, 3
      %v1478 = vld [vmem:[%s1477] sm:$0x1]
      %s1479 = scalar_lea.vmem %s786, 24
      %v1480 = vld [vmem:[%s1479] sm:$0xff]
      %v1482 = vsel %vm1226, %v1480, 0
      %1484 = vmatprep.subr.mxu0 0.0
      %1485 = vmatpush1.msra.mxu0 0.0
      %1486 = vmatprep.subr.mxu0 0.0
      %1487 = vmatpush1.msra.mxu0 0.0
      %1488 = vmatprep.subr.mxu0 0.0
      %1489 = vmatpush1.msra.mxu0 0.0
      %1490 = vmatprep.subr.mxu0 0.0
      %1491 = vmatpush1.msra.mxu0 0.0
      %1492 = vmatprep.subr.mxu0 0.0
      %1493 = vmatpush1.msra.mxu0 0.0
      %1494 = vmatprep.subr.mxu0 0.0
      %1495 = vmatpush1.msra.mxu0 0.0
      %1496 = vmatprep.subr.mxu0 0.0
      %1497 = vmatpush1.msra.mxu0 0.0
      %1498 = vmatprep.subr.mxu0 0.0
      %1499 = vmatpush1.msra.mxu0 0.0
      %1500 = vmatprep.subr.mxu0 0.0
      %1501 = vmatpush1.msra.mxu0 0.0
      %1502 = vmatprep.subr.mxu0 0.0
      %1503 = vmatpush1.msra.mxu0 0.0
      %1504 = vmatprep.subr.mxu0 0.0
      %1505 = vmatpush1.msra.mxu0 0.0
      %1506 = vmatprep.subr.mxu0 0.0
      %1507 = vmatpush1.msra.mxu0 0.0
      %1508 = vmatprep.subr.mxu0 0.0
      %1509 = vmatpush1.msra.mxu0 0.0
      %1510 = vmatprep.subr.mxu0 0.0
      %1511 = vmatpush1.msra.mxu0 0.0
      %1512 = vmatprep.subr.mxu0 0.0
      %1513 = vmatpush1.msra.mxu0 0.0
      %1514 = vmatprep.subr.mxu0 0.0
      %1515 = vmatpush1.msra.mxu0 %v1224
      %1516 = vmatprep.subr.mxu0 0.0
      %1517 = vmatpush2.msra.mxu0 0.0
      %1518 = vmatprep.subr.mxu0 0.0
      %1519 = vmatpush2.msra.mxu0 0.0
      %1520 = vmatprep.subr.mxu0 0.0
      %1521 = vmatpush2.msra.mxu0 0.0
      %1522 = vmatprep.subr.mxu0 0.0
      %1523 = vmatpush2.msra.mxu0 0.0
      %1524 = vmatprep.subr.mxu0 0.0
      %1525 = vmatpush2.msra.mxu0 0.0
      %1526 = vmatprep.subr.mxu0 0.0
      %1527 = vmatpush2.msra.mxu0 0.0
      %1528 = vmatprep.subr.mxu0 0.0
      %1529 = vmatpush2.msra.mxu0 0.0
      %1530 = vmatprep.subr.mxu0 0.0
      %1531 = vmatpush2.msra.mxu0 0.0
      %1532 = vmatprep.subr.mxu0 0.0
      %1533 = vmatpush2.msra.mxu0 0.0
      %1534 = vmatprep.subr.mxu0 0.0
      %1535 = vmatpush2.msra.mxu0 0.0
      %1536 = vmatprep.subr.mxu0 0.0
      %1537 = vmatpush2.msra.mxu0 0.0
      %1538 = vmatprep.subr.mxu0 0.0
      %1539 = vmatpush2.msra.mxu0 0.0
      %1540 = vmatprep.subr.mxu0 0.0
      %1541 = vmatpush2.msra.mxu0 0.0
      %1542 = vmatprep.subr.mxu0 0.0
      %1543 = vmatpush2.msra.mxu0 0.0
      %1544 = vmatprep.subr.mxu0 0.0
      %1545 = vmatpush2.msra.mxu0 0.0
      %1546 = vmatprep.subr.mxu0 0.0
      %1547 = vmatpush2.msra.mxu0 0.0
      %1548 = vmatprep.mubr.f32.mxu0 0.0
      %1549 = vmatmul.mubr.f32.gmra.mxu0 %v1482
      %v1550 = vpop.f32.mrf.mxu0
      %v1551 = vadd.f32 0.0, %v1550
      %v1552 = vpop.f32.mrf.mxu0
      %1553 = vdwg.mxu0
      %v1555 = vlaneseq
      %v1556 = vshrl.u32 %v1555, 7
      %v1557 = vsub.s32 0, %v1556
      %v1558 = vrot.slane %v1478, %v1557
      %v1560 = vmul.f32 %v1558, %v1551
      %v1561 = vadd.f32 %v1476, %v1560
      %v1562 = vld [vmem:[%s790] sm:$0xff]
      %v1563 = vadd.f32 %v1561, %v1562
      %v1564 = vmul.f32 %v1563, 0.5
      %v1565 = vmul.f32 %v1563, 0.044715
      %v1566 = vmul.f32 %v1565, %v1563
      %v1567 = vmul.f32 %v1566, %v1563
      %v1568 = vadd.f32 %v1563, %v1567
      %v1569 = vmul.f32 %v1568, 0.7978846
      %v1570 = vtanh.pop %v1569
      %v1571 = vadd.f32 %v1570, 1.0
      %v1572 = vmul.f32 %v1564, %v1571
      %v1573 = vmul.f32 %v1572, %v1132
      %1575 = vrot.lane.b32.xlu0 %v1563, 32
      %v1576 = vpop.permute.xlu0 %1575
      %v1578 = vsel %vm1137, %v1573, %v1576
      %v1579 = vld [vmem:[%s800] sm:$0xff]
      %v1580 = vld [vmem:[%s800 + $0x8] sm:$0xff]
      %v1581 = vld [vmem:[%s800 + $0x10] sm:$0xff]
      %v1582 = vld [vmem:[%s800 + $0x18] sm:$0xff]
      %v1583 = vld [vmem:[%s800 + $0x20] sm:$0xff]
      %v1584 = vld [vmem:[%s800 + $0x28] sm:$0xff]
      %v1585 = vld [vmem:[%s800 + $0x30] sm:$0xff]
      %v1586 = vld [vmem:[%s800 + $0x38] sm:$0xff]
      %v1587 = vld [vmem:[%s803] sm:$0x1]
      %v1589 = vlaneseq
      %v1590 = vshrl.u32 %v1589, 7
      %v1591 = vsub.s32 0, %v1590
      %v1592 = vrot.slane %v1587, %v1591
      %v1595 = vsel %vm869, %v1578, 0
      %1597 = vmatprep.subr.mxu0 0.0
      %1598 = vmatpush1.msra.mxu0 0.0
      %1599 = vmatprep.subr.mxu0 0.0
      %1600 = vmatpush1.msra.mxu0 0.0
      %1601 = vmatprep.subr.mxu0 0.0
      %1602 = vmatpush1.msra.mxu0 0.0
      %1603 = vmatprep.subr.mxu0 0.0
      %1604 = vmatpush1.msra.mxu0 0.0
      %1605 = vmatprep.subr.mxu0 0.0
      %1606 = vmatpush1.msra.mxu0 0.0
      %1607 = vmatprep.subr.mxu0 0.0
      %1608 = vmatpush1.msra.mxu0 0.0
      %1609 = vmatprep.subr.mxu0 0.0
      %1610 = vmatpush1.msra.mxu0 0.0
      %1611 = vmatprep.subr.mxu0 0.0
      %1612 = vmatpush1.msra.mxu0 0.0
      %1613 = vmatprep.subr.mxu0 0.0
      %1614 = vmatpush1.msra.mxu0 %v1586
      %1615 = vmatprep.subr.mxu0 0.0
      %1616 = vmatpush1.msra.mxu0 %v1585
      %1617 = vmatprep.subr.mxu0 0.0
      %1618 = vmatpush1.msra.mxu0 %v1584
      %1619 = vmatprep.subr.mxu0 0.0
      %1620 = vmatpush1.msra.mxu0 %v1583
      %1621 = vmatprep.subr.mxu0 0.0
      %1622 = vmatpush1.msra.mxu0 %v1582
      %1623 = vmatprep.subr.mxu0 0.0
      %1624 = vmatpush1.msra.mxu0 %v1581
      %1625 = vmatprep.subr.mxu0 0.0
      %1626 = vmatpush1.msra.mxu0 %v1580
      %1627 = vmatprep.subr.mxu0 0.0
      %1628 = vmatpush1.msra.mxu0 %v1579
      %1629 = vmatprep.subr.mxu0 0.0
      %1630 = vmatpush2.msra.mxu0 0.0
      %1631 = vmatprep.subr.mxu0 0.0
      %1632 = vmatpush2.msra.mxu0 0.0
      %1633 = vmatprep.subr.mxu0 0.0
      %1634 = vmatpush2.msra.mxu0 0.0
      %1635 = vmatprep.subr.mxu0 0.0
      %1636 = vmatpush2.msra.mxu0 0.0
      %1637 = vmatprep.subr.mxu0 0.0
      %1638 = vmatpush2.msra.mxu0 0.0
      %1639 = vmatprep.subr.mxu0 0.0
      %1640 = vmatpush2.msra.mxu0 0.0
      %1641 = vmatprep.subr.mxu0 0.0
      %1642 = vmatpush2.msra.mxu0 0.0
      %1643 = vmatprep.subr.mxu0 0.0
      %1644 = vmatpush2.msra.mxu0 0.0
      %1645 = vmatprep.subr.mxu0 0.0
      %1646 = vmatpush2.msra.mxu0 0.0
      %1647 = vmatprep.subr.mxu0 0.0
      %1648 = vmatpush2.msra.mxu0 0.0
      %1649 = vmatprep.subr.mxu0 0.0
      %1650 = vmatpush2.msra.mxu0 0.0
      %1651 = vmatprep.subr.mxu0 0.0
      %1652 = vmatpush2.msra.mxu0 0.0
      %1653 = vmatprep.subr.mxu0 0.0
      %1654 = vmatpush2.msra.mxu0 0.0
      %1655 = vmatprep.subr.mxu0 0.0
      %1656 = vmatpush2.msra.mxu0 0.0
      %1657 = vmatprep.subr.mxu0 0.0
      %1658 = vmatpush2.msra.mxu0 0.0
      %1659 = vmatprep.subr.mxu0 0.0
      %1660 = vmatpush2.msra.mxu0 0.0
      %1661 = vmatprep.mubr.f32.mxu0 0.0
      %1662 = vmatmul.mubr.f32.gmra.mxu0 %v1595
      %v1663 = vpop.f32.mrf.mxu0
      %v1664 = vadd.f32 %v1592, %v1663
      %v1665 = vpop.f32.mrf.mxu0
      %1666 = vdwg.mxu0
      %v1667 = vadd.f32 %v868, %v1664
      %1668 = vst.msk [vmem:[#allocation2] sm:$0xff] %vm869, %v1667
      %p1669 = scmp.eq.s32.totalorder %s35, 1
      // Predicated region
      $region101: #{gmlp_split_forward.1} parent=95 // pred_check
        %p1670 = pneg %p1669
      $region102: #{gmlp_split_forward.1} parent=95 // pred_check_branch
        %1672 = sbr.rel (%p1670) target = $region104
      $region103: #{gmlp_split_forward.1} parent=95 // pred_region
        %v1673 = vld [vmem:[#allocation2] sm:$0xff]
        %v1675 = vsel %vm869, %v1673, 0
        %1677 = vmatprep.subr.mxu0 0.0
        %1678 = vmatpush1.msra.mxu0 0.0
        %1679 = vmatprep.subr.mxu0 0.0
        %1680 = vmatpush1.msra.mxu0 0.0
        %1681 = vmatprep.subr.mxu0 0.0
        %1682 = vmatpush1.msra.mxu0 0.0
        %1683 = vmatprep.subr.mxu0 0.0
        %1684 = vmatpush1.msra.mxu0 0.0
        %1685 = vmatprep.subr.mxu0 0.0
        %1686 = vmatpush1.msra.mxu0 0.0
        %1687 = vmatprep.subr.mxu0 0.0
        %1688 = vmatpush1.msra.mxu0 0.0
        %1689 = vmatprep.subr.mxu0 0.0
        %1690 = vmatpush1.msra.mxu0 0.0
        %1691 = vmatprep.subr.mxu0 0.0
        %1692 = vmatpush1.msra.mxu0 0.0
        %1693 = vmatprep.subr.mxu0 0.0
        %1694 = vmatpush1.msra.mxu0 %v815
        %1695 = vmatprep.subr.mxu0 0.0
        %1696 = vmatpush1.msra.mxu0 %v814
        %1697 = vmatprep.subr.mxu0 0.0
        %1698 = vmatpush1.msra.mxu0 %v813
        %1699 = vmatprep.subr.mxu0 0.0
        %1700 = vmatpush1.msra.mxu0 %v812
        %1701 = vmatprep.subr.mxu0 0.0
        %1702 = vmatpush1.msra.mxu0 %v811
        %1703 = vmatprep.subr.mxu0 0.0
        %1704 = vmatpush1.msra.mxu0 %v810
        %1705 = vmatprep.subr.mxu0 0.0
        %1706 = vmatpush1.msra.mxu0 %v809
        %1707 = vmatprep.subr.mxu0 0.0
        %1708 = vmatpush1.msra.mxu0 %v808
        %1709 = vmatprep.subr.mxu0 0.0
        %1710 = vmatpush2.msra.mxu0 0.0
        %1711 = vmatprep.subr.mxu0 0.0
        %1712 = vmatpush2.msra.mxu0 0.0
        %1713 = vmatprep.subr.mxu0 0.0
        %1714 = vmatpush2.msra.mxu0 0.0
        %1715 = vmatprep.subr.mxu0 0.0
        %1716 = vmatpush2.msra.mxu0 0.0
        %1717 = vmatprep.subr.mxu0 0.0
        %1718 = vmatpush2.msra.mxu0 0.0
        %1719 = vmatprep.subr.mxu0 0.0
        %1720 = vmatpush2.msra.mxu0 0.0
        %1721 = vmatprep.subr.mxu0 0.0
        %1722 = vmatpush2.msra.mxu0 0.0
        %1723 = vmatprep.subr.mxu0 0.0
        %1724 = vmatpush2.msra.mxu0 0.0
        %1725 = vmatprep.subr.mxu0 0.0
        %1726 = vmatpush2.msra.mxu0 0.0
        %1727 = vmatprep.subr.mxu0 0.0
        %1728 = vmatpush2.msra.mxu0 0.0
        %1729 = vmatprep.subr.mxu0 0.0
        %1730 = vmatpush2.msra.mxu0 0.0
        %1731 = vmatprep.subr.mxu0 0.0
        %1732 = vmatpush2.msra.mxu0 0.0
        %1733 = vmatprep.subr.mxu0 0.0
        %1734 = vmatpush2.msra.mxu0 0.0
        %1735 = vmatprep.subr.mxu0 0.0
        %1736 = vmatpush2.msra.mxu0 0.0
        %1737 = vmatprep.subr.mxu0 0.0
        %1738 = vmatpush2.msra.mxu0 0.0
        %1739 = vmatprep.subr.mxu0 0.0
        %1740 = vmatpush2.msra.mxu0 0.0
        %1741 = vmatprep.mubr.f32.mxu0 0.0
        %1742 = vmatmul.mubr.f32.gmra.mxu0 %v1675
        %v1743 = vpop.f32.mrf.mxu0
        %v1744 = vadd.f32 0.0, %v1743
        %v1745 = vpop.f32.mrf.mxu0
        %1746 = vdwg.mxu0
        %v1747 = vsub.f32 %v1673, %v1744
        %v1748 = vmul.f32 %v1747, %v1747
        %v1750 = vsel %vm869, %v1748, 0
        %1752 = vmatprep.subr.mxu0 0.0
        %1753 = vmatpush1.msra.mxu0 0.0
        %1754 = vmatprep.subr.mxu0 0.0
        %1755 = vmatpush1.msra.mxu0 0.0
        %1756 = vmatprep.subr.mxu0 0.0
        %1757 = vmatpush1.msra.mxu0 0.0
        %1758 = vmatprep.subr.mxu0 0.0
        %1759 = vmatpush1.msra.mxu0 0.0
        %1760 = vmatprep.subr.mxu0 0.0
        %1761 = vmatpush1.msra.mxu0 0.0
        %1762 = vmatprep.subr.mxu0 0.0
        %1763 = vmatpush1.msra.mxu0 0.0
        %1764 = vmatprep.subr.mxu0 0.0
        %1765 = vmatpush1.msra.mxu0 0.0
        %1766 = vmatprep.subr.mxu0 0.0
        %1767 = vmatpush1.msra.mxu0 0.0
        %1768 = vmatprep.subr.mxu0 0.0
        %1769 = vmatpush1.msra.mxu0 %v815
        %1770 = vmatprep.subr.mxu0 0.0
        %1771 = vmatpush1.msra.mxu0 %v814
        %1772 = vmatprep.subr.mxu0 0.0
        %1773 = vmatpush1.msra.mxu0 %v813
        %1774 = vmatprep.subr.mxu0 0.0
        %1775 = vmatpush1.msra.mxu0 %v812
        %1776 = vmatprep.subr.mxu0 0.0
        %1777 = vmatpush1.msra.mxu0 %v811
        %1778 = vmatprep.subr.mxu0 0.0
        %1779 = vmatpush1.msra.mxu0 %v810
        %1780 = vmatprep.subr.mxu0 0.0
        %1781 = vmatpush1.msra.mxu0 %v809
        %1782 = vmatprep.subr.mxu0 0.0
        %1783 = vmatpush1.msra.mxu0 %v808
        %1784 = vmatprep.subr.mxu0 0.0
        %1785 = vmatpush2.msra.mxu0 0.0
        %1786 = vmatprep.subr.mxu0 0.0
        %1787 = vmatpush2.msra.mxu0 0.0
        %1788 = vmatprep.subr.mxu0 0.0
        %1789 = vmatpush2.msra.mxu0 0.0
        %1790 = vmatprep.subr.mxu0 0.0
        %1791 = vmatpush2.msra.mxu0 0.0
        %1792 = vmatprep.subr.mxu0 0.0
        %1793 = vmatpush2.msra.mxu0 0.0
        %1794 = vmatprep.subr.mxu0 0.0
        %1795 = vmatpush2.msra.mxu0 0.0
        %1796 = vmatprep.subr.mxu0 0.0
        %1797 = vmatpush2.msra.mxu0 0.0
        %1798 = vmatprep.subr.mxu0 0.0
        %1799 = vmatpush2.msra.mxu0 0.0
        %1800 = vmatprep.subr.mxu0 0.0
        %1801 = vmatpush2.msra.mxu0 0.0
        %1802 = vmatprep.subr.mxu0 0.0
        %1803 = vmatpush2.msra.mxu0 0.0
        %1804 = vmatprep.subr.mxu0 0.0
        %1805 = vmatpush2.msra.mxu0 0.0
        %1806 = vmatprep.subr.mxu0 0.0
        %1807 = vmatpush2.msra.mxu0 0.0
        %1808 = vmatprep.subr.mxu0 0.0
        %1809 = vmatpush2.msra.mxu0 0.0
        %1810 = vmatprep.subr.mxu0 0.0
        %1811 = vmatpush2.msra.mxu0 0.0
        %1812 = vmatprep.subr.mxu0 0.0
        %1813 = vmatpush2.msra.mxu0 0.0
        %1814 = vmatprep.subr.mxu0 0.0
        %1815 = vmatpush2.msra.mxu0 0.0
        %1816 = vmatprep.mubr.f32.mxu0 0.0
        %1817 = vmatmul.mubr.f32.gmra.mxu0 %v1750
        %v1818 = vpop.f32.mrf.mxu0
        %v1819 = vadd.f32 1e-05, %v1818
        %v1820 = vpop.f32.mrf.mxu0
        %1821 = vdwg.mxu0
        %v1822 = vrsqrt.pop %v1819
        %v1823 = vmul.f32 %v1747, %v1822
        %v1824 = vld [vmem:[%s4] sm:$0x1]
        %v1826 = vlaneseq
        %v1827 = vshrl.u32 %v1826, 7
        %v1828 = vsub.s32 0, %v1827
        %v1829 = vrot.slane %v1824, %v1828
        %v1831 = vmul.f32 %v1823, %v1829
        %v1832 = vld [vmem:[%s5] sm:$0x1]
        %v1834 = vlaneseq
        %v1835 = vshrl.u32 %v1834, 7
        %v1836 = vsub.s32 0, %v1835
        %v1837 = vrot.slane %v1832, %v1836
        %v1839 = vadd.f32 %v1831, %v1837
        %v1840 = vld [vmem:[%s6] sm:$0xff]
        %v1841 = vld [vmem:[%s6 + $0x8] sm:$0xff]
        %v1842 = vld [vmem:[%s6 + $0x10] sm:$0xff]
        %v1843 = vld [vmem:[%s6 + $0x18] sm:$0xff]
        %v1844 = vld [vmem:[%s6 + $0x20] sm:$0xff]
        %v1845 = vld [vmem:[%s6 + $0x28] sm:$0xff]
        %v1846 = vld [vmem:[%s6 + $0x30] sm:$0xff]
        %v1847 = vld [vmem:[%s6 + $0x38] sm:$0xff]
        %v1848 = vld [vmem:[%s7] sm:$0x1]
        %v1850 = vlaneseq
        %v1851 = vshrl.u32 %v1850, 7
        %v1852 = vsub.s32 0, %v1851
        %v1853 = vrot.slane %v1848, %v1852
        %v1856 = vsel %vm869, %v1839, 0
        %1858 = vmatprep.subr.mxu0 0.0
        %1859 = vmatpush1.msra.mxu0 0.0
        %1860 = vmatprep.subr.mxu0 0.0
        %1861 = vmatpush1.msra.mxu0 0.0
        %1862 = vmatprep.subr.mxu0 0.0
        %1863 = vmatpush1.msra.mxu0 0.0
        %1864 = vmatprep.subr.mxu0 0.0
        %1865 = vmatpush1.msra.mxu0 0.0
        %1866 = vmatprep.subr.mxu0 0.0
        %1867 = vmatpush1.msra.mxu0 0.0
        %1868 = vmatprep.subr.mxu0 0.0
        %1869 = vmatpush1.msra.mxu0 0.0
        %1870 = vmatprep.subr.mxu0 0.0
        %1871 = vmatpush1.msra.mxu0 0.0
        %1872 = vmatprep.subr.mxu0 0.0
        %1873 = vmatpush1.msra.mxu0 0.0
        %1874 = vmatprep.subr.mxu0 0.0
        %1875 = vmatpush1.msra.mxu0 %v1847
        %1876 = vmatprep.subr.mxu0 0.0
        %1877 = vmatpush1.msra.mxu0 %v1846
        %1878 = vmatprep.subr.mxu0 0.0
        %1879 = vmatpush1.msra.mxu0 %v1845
        %1880 = vmatprep.subr.mxu0 0.0
        %1881 = vmatpush1.msra.mxu0 %v1844
        %1882 = vmatprep.subr.mxu0 0.0
        %1883 = vmatpush1.msra.mxu0 %v1843
        %1884 = vmatprep.subr.mxu0 0.0
        %1885 = vmatpush1.msra.mxu0 %v1842
        %1886 = vmatprep.subr.mxu0 0.0
        %1887 = vmatpush1.msra.mxu0 %v1841
        %1888 = vmatprep.subr.mxu0 0.0
        %1889 = vmatpush1.msra.mxu0 %v1840
        %1890 = vmatprep.subr.mxu0 0.0
        %1891 = vmatpush2.msra.mxu0 0.0
        %1892 = vmatprep.subr.mxu0 0.0
        %1893 = vmatpush2.msra.mxu0 0.0
        %1894 = vmatprep.subr.mxu0 0.0
        %1895 = vmatpush2.msra.mxu0 0.0
        %1896 = vmatprep.subr.mxu0 0.0
        %1897 = vmatpush2.msra.mxu0 0.0
        %1898 = vmatprep.subr.mxu0 0.0
        %1899 = vmatpush2.msra.mxu0 0.0
        %1900 = vmatprep.subr.mxu0 0.0
        %1901 = vmatpush2.msra.mxu0 0.0
        %1902 = vmatprep.subr.mxu0 0.0
        %1903 = vmatpush2.msra.mxu0 0.0
        %1904 = vmatprep.subr.mxu0 0.0
        %1905 = vmatpush2.msra.mxu0 0.0
        %1906 = vmatprep.subr.mxu0 0.0
        %1907 = vmatpush2.msra.mxu0 0.0
        %1908 = vmatprep.subr.mxu0 0.0
        %1909 = vmatpush2.msra.mxu0 0.0
        %1910 = vmatprep.subr.mxu0 0.0
        %1911 = vmatpush2.msra.mxu0 0.0
        %1912 = vmatprep.subr.mxu0 0.0
        %1913 = vmatpush2.msra.mxu0 0.0
        %1914 = vmatprep.subr.mxu0 0.0
        %1915 = vmatpush2.msra.mxu0 0.0
        %1916 = vmatprep.subr.mxu0 0.0
        %1917 = vmatpush2.msra.mxu0 0.0
        %1918 = vmatprep.subr.mxu0 0.0
        %1919 = vmatpush2.msra.mxu0 0.0
        %1920 = vmatprep.subr.mxu0 0.0
        %1921 = vmatpush2.msra.mxu0 0.0
        %1922 = vmatprep.mubr.f32.mxu0 0.0
        %1923 = vmatmul.mubr.f32.gmra.mxu0 %v1856
        %v1924 = vpop.f32.mrf.mxu0
        %v1925 = vadd.f32 %v1853, %v1924
        %v1926 = vpop.f32.mrf.mxu0
        %1927 = vdwg.mxu0
        %1929 = vrot.lane.b32.xlu0 %v1925, 64
        %v1930 = vpop.permute.xlu0 %1929
        %v1932 = vsel %vm869, %v1673, %v1930
        %1933 = vst [vmem:[%s807] sm:$0xff] %v1932
      $region104: #{gmlp_split_forward.1} parent=95 // pred_fallthru
        _
      %p1934 = scmp.lt.s32.totalorder %s34, 1
      %s1935 = scalar_select %p1934, %s34, 1
      %s1936 = smul.addr %s1935, 8
      %s1937 = scalar_lea.vmem %s19, %s1936
      // Predicated region
      $region105: #{gmlp_split_forward.1} parent=95 // pred_check
        %p1938 = pneg %p524
      $region106: #{gmlp_split_forward.1} parent=95 // pred_check_branch
        %1940 = sbr.rel (%p1938) target = $region108
      $region107: #{gmlp_split_forward.1} parent=95 // pred_region
        _
      $region108: #{gmlp_split_forward.1} parent=95 // pred_fallthru
        _
    $region96: #{gmlp_split_forward.1} parent=5 // pred_fallthru
      _
    %p1941 = scmp.le.s32.totalorder 2, %s25
    // Predicated region
    $region109: #{gmlp_split_forward.1} parent=5 // pred_check
      %p1942 = pneg %p1941
    $region110: #{gmlp_split_forward.1} parent=5 // pred_check_branch
      %1944 = sbr.rel (%p1942) target = $region112
    $region111: #{gmlp_split_forward.1} parent=5 // pred_region
      %s1945 = ssub.s32 %s25, 2
      // Predicated region
      $region113: #{gmlp_split_forward.1} parent=111 // pred_check
        %p1946 = pneg %p530
      $region114: #{gmlp_split_forward.1} parent=111 // pred_check_branch
        %1948 = sbr.rel (%p1946) target = $region116
      $region115: #{gmlp_split_forward.1} parent=111 // pred_region
        %p1949 = scmp.lt.s32.totalorder %s36, 1
        %s1950 = scalar_select %p1949, %s36, 1
        %s1951 = smul.addr %s1950, 8
        %s1952 = scalar_lea.vmem %s19, %s1951
      $region116: #{gmlp_split_forward.1} parent=111 // pred_fallthru
        _
    $region112: #{gmlp_split_forward.1} parent=5 // pred_fallthru
      _
  $region6: #{gmlp_split_forward.1} parent=0 // loop_footer
    %s29 = sadd.s32 1, %s25
  $region7: #{gmlp_split_forward.1} parent=0 // loop_footer_branch
    %24 = sbr.rel target = $region3
  $region8: #{gmlp_split_forward.1} parent=0 // loop_exit
    _

</llo_original>
